<compile_context>
chip_gen: v7x
topology: tpu7x:2x2x1
jax: 0.10.0
libtpu: 0.0.40
codegen_flags: <defaults>
</compile_context>

<pallas_src>
import functools

import jax
import jax.numpy as jnp
from jax.experimental import pallas as pl
from jax.experimental.pallas import tpu as pltpu


def review_rep_kernel(x_ref, wxs_ref, whs_ref, bx_ref, bhn_ref,
                      wl_ref, bl_ref, out_ref, *, T, B, H):
    """Single-invocation kernel: GRU recurrence + tanh + Iliked projection.

    x_ref   : (T*B, D)   time-major inputs, flattened over (T, B)
    wxs_ref : (D, 3H)    stacked input->gate weights, gate order (r, z, n)
    whs_ref : (H, 3H)    stacked hidden->gate weights, gate order (r, z, n)
    bx_ref  : (1, 3H)    biases: [bx_r+bh_r | bx_z+bh_z | bx_n]
    bhn_ref : (1, H)     bh_n (applied inside the r*(...) term)
    wl_ref  : (H, M)     Iliked weight
    bl_ref  : (1, M)     Iliked bias
    out_ref : (B, M)
    """
    # Time-parallel input projection for ALL steps at once (one MXU matmul,
    # off the serial critical path).
    xp = jnp.dot(x_ref[...], wxs_ref[...],
                 preferred_element_type=jnp.float32) + bx_ref[...]   # (T*B, 3H)

    whs = whs_ref[...]        # (H, 3H), hoisted out of the loop
    bhn = bhn_ref[...]        # (1, H)

    h = jnp.zeros((B, H), jnp.float32)
    # Static unroll over the short time axis; only h @ Wh stays serial.
    for t in range(T):
        gx = xp[t * B:(t + 1) * B, :]                                 # (B, 3H)
        hp = jnp.dot(h, whs, preferred_element_type=jnp.float32)      # (B, 3H)
        r = jax.nn.sigmoid(gx[:, :H] + hp[:, :H])
        z = jax.nn.sigmoid(gx[:, H:2 * H] + hp[:, H:2 * H])
        n = jnp.tanh(gx[:, 2 * H:] + r * (hp[:, 2 * H:] + bhn))
        h = (1.0 - z) * n + z * h

    # ReviewRepTrainer head:  Iliked( tanh(conversation_rep) )
    rep = jnp.tanh(h)                                                 # (B, H)
    out_ref[...] = (jnp.dot(rep, wl_ref[...],
                            preferred_element_type=jnp.float32)
                    + bl_ref[...])                                    # (B, M)


def review_rep_forward(x, wx, wh, bx, bh, w_liked, b_liked):
    """x: (T, B, D); wx: (3, D, H); wh: (3, H, H); bx/bh: (3, 1, H);
    w_liked: (H, M); b_liked: (1, M). Gate order (r, z, n) = torch.nn.GRUCell."""
    T, B, D = x.shape
    H = wh.shape[-1]
    M = w_liked.shape[-1]

    # Fuse per-gate weights into lane-dense stacks (done once, outside the kernel).
    wx_s = jnp.concatenate([wx[0], wx[1], wx[2]], axis=-1)            # (D, 3H)
    wh_s = jnp.concatenate([wh[0], wh[1], wh[2]], axis=-1)            # (H, 3H)
    # Pre-sum r/z biases; keep the n-gate hidden bias separate (it sits inside r*(...)).
    bias_x = jnp.concatenate([bx[0] + bh[0], bx[1] + bh[1], bx[2]], axis=-1)  # (1, 3H)
    bias_hn = bh[2]                                                   # (1, H)

    x2 = x.reshape(T * B, D)

    vmem = pl.BlockSpec(memory_space=pltpu.MemorySpace.VMEM)
    kernel = functools.partial(review_rep_kernel, T=T, B=B, H=H)

    return pl.pallas_call(
        kernel,
        out_shape=jax.ShapeDtypeStruct((B, M), jnp.float32),
        in_specs=[vmem] * 7,
        out_specs=pl.BlockSpec(memory_space=pltpu.MemorySpace.VMEM),
    )(x2, wx_s, wh_s, bias_x, bias_hn, w_liked, b_liked)


def review_rep_reference(x, wx, wh, bx, bh, w_liked, b_liked):
    """Pure-JAX reference of the same computation (torch.nn.GRUCell semantics)."""
    T, B, D = x.shape
    H = wh.shape[-1]
    h = jnp.zeros((B, H), jnp.float32)
    for t in range(T):
        xt = x[t]
        r = jax.nn.sigmoid(xt @ wx[0] + bx[0] + h @ wh[0] + bh[0])
        z = jax.nn.sigmoid(xt @ wx[1] + bx[1] + h @ wh[1] + bh[1])
        n = jnp.tanh(xt @ wx[2] + bx[2] + r * (h @ wh[2] + bh[2]))
        h = (1.0 - z) * n + z * h
    return jnp.tanh(h) @ w_liked + b_liked


if __name__ == "__main__":
    # Small shapes consistent with the module:
    #   seq (T)=8, batch (B)=8, gensen-ish input dim (D)=64,
    #   conversation_encoder_hidden_size (H)=128, n_movies (M)=256
    # (B=8 sublanes, H/M multiples of 128 lanes for dense vreg/vst usage.)
    T, B, D, H, M = 8, 8, 64, 128, 256

    key = jax.random.PRNGKey(0)
    k = jax.random.split(key, 8)
    x       = jax.random.normal(k[0], (T, B, D), jnp.float32)
    wx      = 0.1 * jax.random.normal(k[1], (3, D, H), jnp.float32)
    wh      = 0.1 * jax.random.normal(k[2], (3, H, H), jnp.float32)
    bx      = 0.1 * jax.random.normal(k[3], (3, 1, H), jnp.float32)
    bh      = 0.1 * jax.random.normal(k[4], (3, 1, H), jnp.float32)
    w_liked = 0.1 * jax.random.normal(k[5], (H, M), jnp.float32)
    b_liked = 0.1 * jax.random.normal(k[6], (1, M), jnp.float32)

    out = review_rep_forward(x, wx, wh, bx, bh, w_liked, b_liked)
    out = jax.block_until_ready(out)

    ref = review_rep_reference(x, wx, wh, bx, bh, w_liked, b_liked)
    assert out.shape == (B, M)
    assert jnp.allclose(out, ref, atol=1e-4, rtol=1e-4), "mismatch vs reference"

    print("KERNEL_OK")
</pallas_src>

<mosaic_0001>
module attributes {stable_mosaic.version = 11 : i64} {
  func.func @review_rep_kernel(%arg0: memref<64x64xf32, #tpu.memory_space<vmem>>, %arg1: memref<64x384xf32, #tpu.memory_space<vmem>>, %arg2: memref<128x384xf32, #tpu.memory_space<vmem>>, %arg3: memref<1x384xf32, #tpu.memory_space<vmem>>, %arg4: memref<1x128xf32, #tpu.memory_space<vmem>>, %arg5: memref<128x256xf32, #tpu.memory_space<vmem>>, %arg6: memref<1x256xf32, #tpu.memory_space<vmem>>, %arg7: memref<8x256xf32, #tpu.memory_space<vmem>>) attributes {dimension_semantics = [], scalar_prefetch = 0 : i64, scratch_operands = 0 : i64, tpu.core_type = #tpu.core_type<tc>} {
    %c0 = arith.constant 0 : index
    %c0_0 = arith.constant 0 : index
    %0 = vector.load %arg0[%c0, %c0_0] : memref<64x64xf32, #tpu.memory_space<vmem>>, vector<64x64xf32>
    %c0_1 = arith.constant 0 : index
    %c0_2 = arith.constant 0 : index
    %1 = vector.load %arg1[%c0_1, %c0_2] : memref<64x384xf32, #tpu.memory_space<vmem>>, vector<64x384xf32>
    %cst = arith.constant dense<0.000000e+00> : vector<64x384xf32>
    %2 = tpu.matmul %0, %1, %cst {dimension_numbers = #tpu.dot_dimension_numbers<[1], [0], [0], [1], [0, 0, 1, 1], [], []>} : vector<64x64xf32>, vector<64x384xf32>, vector<64x384xf32> -> vector<64x384xf32>
    %c0_3 = arith.constant 0 : index
    %c0_4 = arith.constant 0 : index
    %3 = vector.load %arg3[%c0_3, %c0_4] : memref<1x384xf32, #tpu.memory_space<vmem>>, vector<1x384xf32>
    %4 = vector.broadcast %3 : vector<1x384xf32> to vector<64x384xf32>
    %5 = arith.addf %2, %4 : vector<64x384xf32>
    %c0_5 = arith.constant 0 : index
    %c0_6 = arith.constant 0 : index
    %6 = vector.load %arg2[%c0_5, %c0_6] : memref<128x384xf32, #tpu.memory_space<vmem>>, vector<128x384xf32>
    %c0_7 = arith.constant 0 : index
    %c0_8 = arith.constant 0 : index
    %7 = vector.load %arg4[%c0_7, %c0_8] : memref<1x128xf32, #tpu.memory_space<vmem>>, vector<1x128xf32>
    %cst_9 = arith.constant 0.000000e+00 : f32
    %8 = vector.broadcast %cst_9 : f32 to vector<8x128xf32>
    %9 = vector.extract_strided_slice %5 {offsets = [0, 0], sizes = [8, 384], strides = [1, 1]} : vector<64x384xf32> to vector<8x384xf32>
    %cst_10 = arith.constant dense<0.000000e+00> : vector<8x384xf32>
    %10 = tpu.matmul %8, %6, %cst_10 {dimension_numbers = #tpu.dot_dimension_numbers<[1], [0], [0], [1], [0, 0, 1, 1], [], []>} : vector<8x128xf32>, vector<128x384xf32>, vector<8x384xf32> -> vector<8x384xf32>
    %11 = vector.extract_strided_slice %9 {offsets = [0, 0], sizes = [8, 128], strides = [1, 1]} : vector<8x384xf32> to vector<8x128xf32>
    %12 = vector.extract_strided_slice %10 {offsets = [0, 0], sizes = [8, 128], strides = [1, 1]} : vector<8x384xf32> to vector<8x128xf32>
    %13 = arith.addf %11, %12 : vector<8x128xf32>
    %14 = arith.negf %13 : vector<8x128xf32>
    %15 = math.exp %14 : vector<8x128xf32>
    %cst_11 = arith.constant 1.000000e+00 : f32
    %16 = vector.broadcast %cst_11 : f32 to vector<8x128xf32>
    %17 = arith.addf %16, %15 : vector<8x128xf32>
    %18 = arith.divf %16, %17 : vector<8x128xf32>
    %19 = vector.extract_strided_slice %9 {offsets = [0, 128], sizes = [8, 128], strides = [1, 1]} : vector<8x384xf32> to vector<8x128xf32>
    %20 = vector.extract_strided_slice %10 {offsets = [0, 128], sizes = [8, 128], strides = [1, 1]} : vector<8x384xf32> to vector<8x128xf32>
    %21 = arith.addf %19, %20 : vector<8x128xf32>
    %22 = arith.negf %21 : vector<8x128xf32>
    %23 = math.exp %22 : vector<8x128xf32>
    %cst_12 = arith.constant 1.000000e+00 : f32
    %24 = vector.broadcast %cst_12 : f32 to vector<8x128xf32>
    %25 = arith.addf %24, %23 : vector<8x128xf32>
    %26 = arith.divf %24, %25 : vector<8x128xf32>
    %27 = vector.extract_strided_slice %9 {offsets = [0, 256], sizes = [8, 128], strides = [1, 1]} : vector<8x384xf32> to vector<8x128xf32>
    %28 = vector.extract_strided_slice %10 {offsets = [0, 256], sizes = [8, 128], strides = [1, 1]} : vector<8x384xf32> to vector<8x128xf32>
    %29 = vector.broadcast %7 : vector<1x128xf32> to vector<8x128xf32>
    %30 = arith.addf %28, %29 : vector<8x128xf32>
    %31 = arith.mulf %18, %30 : vector<8x128xf32>
    %32 = arith.addf %27, %31 : vector<8x128xf32>
    %33 = math.tanh %32 : vector<8x128xf32>
    %cst_13 = arith.constant 1.000000e+00 : f32
    %34 = vector.broadcast %cst_13 : f32 to vector<8x128xf32>
    %35 = arith.subf %34, %26 : vector<8x128xf32>
    %36 = arith.mulf %35, %33 : vector<8x128xf32>
    %37 = arith.mulf %26, %8 : vector<8x128xf32>
    %38 = arith.addf %36, %37 : vector<8x128xf32>
    %39 = vector.extract_strided_slice %5 {offsets = [8, 0], sizes = [8, 384], strides = [1, 1]} : vector<64x384xf32> to vector<8x384xf32>
    %cst_14 = arith.constant dense<0.000000e+00> : vector<8x384xf32>
    %40 = tpu.matmul %38, %6, %cst_14 {dimension_numbers = #tpu.dot_dimension_numbers<[1], [0], [0], [1], [0, 0, 1, 1], [], []>} : vector<8x128xf32>, vector<128x384xf32>, vector<8x384xf32> -> vector<8x384xf32>
    %41 = vector.extract_strided_slice %39 {offsets = [0, 0], sizes = [8, 128], strides = [1, 1]} : vector<8x384xf32> to vector<8x128xf32>
    %42 = vector.extract_strided_slice %40 {offsets = [0, 0], sizes = [8, 128], strides = [1, 1]} : vector<8x384xf32> to vector<8x128xf32>
    %43 = arith.addf %41, %42 : vector<8x128xf32>
    %44 = arith.negf %43 : vector<8x128xf32>
    %45 = math.exp %44 : vector<8x128xf32>
    %cst_15 = arith.constant 1.000000e+00 : f32
    %46 = vector.broadcast %cst_15 : f32 to vector<8x128xf32>
    %47 = arith.addf %46, %45 : vector<8x128xf32>
    %48 = arith.divf %46, %47 : vector<8x128xf32>
    %49 = vector.extract_strided_slice %39 {offsets = [0, 128], sizes = [8, 128], strides = [1, 1]} : vector<8x384xf32> to vector<8x128xf32>
    %50 = vector.extract_strided_slice %40 {offsets = [0, 128], sizes = [8, 128], strides = [1, 1]} : vector<8x384xf32> to vector<8x128xf32>
    %51 = arith.addf %49, %50 : vector<8x128xf32>
    %52 = arith.negf %51 : vector<8x128xf32>
    %53 = math.exp %52 : vector<8x128xf32>
    %cst_16 = arith.constant 1.000000e+00 : f32
    %54 = vector.broadcast %cst_16 : f32 to vector<8x128xf32>
    %55 = arith.addf %54, %53 : vector<8x128xf32>
    %56 = arith.divf %54, %55 : vector<8x128xf32>
    %57 = vector.extract_strided_slice %39 {offsets = [0, 256], sizes = [8, 128], strides = [1, 1]} : vector<8x384xf32> to vector<8x128xf32>
    %58 = vector.extract_strided_slice %40 {offsets = [0, 256], sizes = [8, 128], strides = [1, 1]} : vector<8x384xf32> to vector<8x128xf32>
    %59 = vector.broadcast %7 : vector<1x128xf32> to vector<8x128xf32>
    %60 = arith.addf %58, %59 : vector<8x128xf32>
    %61 = arith.mulf %48, %60 : vector<8x128xf32>
    %62 = arith.addf %57, %61 : vector<8x128xf32>
    %63 = math.tanh %62 : vector<8x128xf32>
    %cst_17 = arith.constant 1.000000e+00 : f32
    %64 = vector.broadcast %cst_17 : f32 to vector<8x128xf32>
    %65 = arith.subf %64, %56 : vector<8x128xf32>
    %66 = arith.mulf %65, %63 : vector<8x128xf32>
    %67 = arith.mulf %56, %38 : vector<8x128xf32>
    %68 = arith.addf %66, %67 : vector<8x128xf32>
    %69 = vector.extract_strided_slice %5 {offsets = [16, 0], sizes = [8, 384], strides = [1, 1]} : vector<64x384xf32> to vector<8x384xf32>
    %cst_18 = arith.constant dense<0.000000e+00> : vector<8x384xf32>
    %70 = tpu.matmul %68, %6, %cst_18 {dimension_numbers = #tpu.dot_dimension_numbers<[1], [0], [0], [1], [0, 0, 1, 1], [], []>} : vector<8x128xf32>, vector<128x384xf32>, vector<8x384xf32> -> vector<8x384xf32>
    %71 = vector.extract_strided_slice %69 {offsets = [0, 0], sizes = [8, 128], strides = [1, 1]} : vector<8x384xf32> to vector<8x128xf32>
    %72 = vector.extract_strided_slice %70 {offsets = [0, 0], sizes = [8, 128], strides = [1, 1]} : vector<8x384xf32> to vector<8x128xf32>
    %73 = arith.addf %71, %72 : vector<8x128xf32>
    %74 = arith.negf %73 : vector<8x128xf32>
    %75 = math.exp %74 : vector<8x128xf32>
    %cst_19 = arith.constant 1.000000e+00 : f32
    %76 = vector.broadcast %cst_19 : f32 to vector<8x128xf32>
    %77 = arith.addf %76, %75 : vector<8x128xf32>
    %78 = arith.divf %76, %77 : vector<8x128xf32>
    %79 = vector.extract_strided_slice %69 {offsets = [0, 128], sizes = [8, 128], strides = [1, 1]} : vector<8x384xf32> to vector<8x128xf32>
    %80 = vector.extract_strided_slice %70 {offsets = [0, 128], sizes = [8, 128], strides = [1, 1]} : vector<8x384xf32> to vector<8x128xf32>
    %81 = arith.addf %79, %80 : vector<8x128xf32>
    %82 = arith.negf %81 : vector<8x128xf32>
    %83 = math.exp %82 : vector<8x128xf32>
    %cst_20 = arith.constant 1.000000e+00 : f32
    %84 = vector.broadcast %cst_20 : f32 to vector<8x128xf32>
    %85 = arith.addf %84, %83 : vector<8x128xf32>
    %86 = arith.divf %84, %85 : vector<8x128xf32>
    %87 = vector.extract_strided_slice %69 {offsets = [0, 256], sizes = [8, 128], strides = [1, 1]} : vector<8x384xf32> to vector<8x128xf32>
    %88 = vector.extract_strided_slice %70 {offsets = [0, 256], sizes = [8, 128], strides = [1, 1]} : vector<8x384xf32> to vector<8x128xf32>
    %89 = vector.broadcast %7 : vector<1x128xf32> to vector<8x128xf32>
    %90 = arith.addf %88, %89 : vector<8x128xf32>
    %91 = arith.mulf %78, %90 : vector<8x128xf32>
    %92 = arith.addf %87, %91 : vector<8x128xf32>
    %93 = math.tanh %92 : vector<8x128xf32>
    %cst_21 = arith.constant 1.000000e+00 : f32
    %94 = vector.broadcast %cst_21 : f32 to vector<8x128xf32>
    %95 = arith.subf %94, %86 : vector<8x128xf32>
    %96 = arith.mulf %95, %93 : vector<8x128xf32>
    %97 = arith.mulf %86, %68 : vector<8x128xf32>
    %98 = arith.addf %96, %97 : vector<8x128xf32>
    %99 = vector.extract_strided_slice %5 {offsets = [24, 0], sizes = [8, 384], strides = [1, 1]} : vector<64x384xf32> to vector<8x384xf32>
    %cst_22 = arith.constant dense<0.000000e+00> : vector<8x384xf32>
    %100 = tpu.matmul %98, %6, %cst_22 {dimension_numbers = #tpu.dot_dimension_numbers<[1], [0], [0], [1], [0, 0, 1, 1], [], []>} : vector<8x128xf32>, vector<128x384xf32>, vector<8x384xf32> -> vector<8x384xf32>
    %101 = vector.extract_strided_slice %99 {offsets = [0, 0], sizes = [8, 128], strides = [1, 1]} : vector<8x384xf32> to vector<8x128xf32>
    %102 = vector.extract_strided_slice %100 {offsets = [0, 0], sizes = [8, 128], strides = [1, 1]} : vector<8x384xf32> to vector<8x128xf32>
    %103 = arith.addf %101, %102 : vector<8x128xf32>
    %104 = arith.negf %103 : vector<8x128xf32>
    %105 = math.exp %104 : vector<8x128xf32>
    %cst_23 = arith.constant 1.000000e+00 : f32
    %106 = vector.broadcast %cst_23 : f32 to vector<8x128xf32>
    %107 = arith.addf %106, %105 : vector<8x128xf32>
    %108 = arith.divf %106, %107 : vector<8x128xf32>
    %109 = vector.extract_strided_slice %99 {offsets = [0, 128], sizes = [8, 128], strides = [1, 1]} : vector<8x384xf32> to vector<8x128xf32>
    %110 = vector.extract_strided_slice %100 {offsets = [0, 128], sizes = [8, 128], strides = [1, 1]} : vector<8x384xf32> to vector<8x128xf32>
    %111 = arith.addf %109, %110 : vector<8x128xf32>
    %112 = arith.negf %111 : vector<8x128xf32>
    %113 = math.exp %112 : vector<8x128xf32>
    %cst_24 = arith.constant 1.000000e+00 : f32
    %114 = vector.broadcast %cst_24 : f32 to vector<8x128xf32>
    %115 = arith.addf %114, %113 : vector<8x128xf32>
    %116 = arith.divf %114, %115 : vector<8x128xf32>
    %117 = vector.extract_strided_slice %99 {offsets = [0, 256], sizes = [8, 128], strides = [1, 1]} : vector<8x384xf32> to vector<8x128xf32>
    %118 = vector.extract_strided_slice %100 {offsets = [0, 256], sizes = [8, 128], strides = [1, 1]} : vector<8x384xf32> to vector<8x128xf32>
    %119 = vector.broadcast %7 : vector<1x128xf32> to vector<8x128xf32>
    %120 = arith.addf %118, %119 : vector<8x128xf32>
    %121 = arith.mulf %108, %120 : vector<8x128xf32>
    %122 = arith.addf %117, %121 : vector<8x128xf32>
    %123 = math.tanh %122 : vector<8x128xf32>
    %cst_25 = arith.constant 1.000000e+00 : f32
    %124 = vector.broadcast %cst_25 : f32 to vector<8x128xf32>
    %125 = arith.subf %124, %116 : vector<8x128xf32>
    %126 = arith.mulf %125, %123 : vector<8x128xf32>
    %127 = arith.mulf %116, %98 : vector<8x128xf32>
    %128 = arith.addf %126, %127 : vector<8x128xf32>
    %129 = vector.extract_strided_slice %5 {offsets = [32, 0], sizes = [8, 384], strides = [1, 1]} : vector<64x384xf32> to vector<8x384xf32>
    %cst_26 = arith.constant dense<0.000000e+00> : vector<8x384xf32>
    %130 = tpu.matmul %128, %6, %cst_26 {dimension_numbers = #tpu.dot_dimension_numbers<[1], [0], [0], [1], [0, 0, 1, 1], [], []>} : vector<8x128xf32>, vector<128x384xf32>, vector<8x384xf32> -> vector<8x384xf32>
    %131 = vector.extract_strided_slice %129 {offsets = [0, 0], sizes = [8, 128], strides = [1, 1]} : vector<8x384xf32> to vector<8x128xf32>
    %132 = vector.extract_strided_slice %130 {offsets = [0, 0], sizes = [8, 128], strides = [1, 1]} : vector<8x384xf32> to vector<8x128xf32>
    %133 = arith.addf %131, %132 : vector<8x128xf32>
    %134 = arith.negf %133 : vector<8x128xf32>
    %135 = math.exp %134 : vector<8x128xf32>
    %cst_27 = arith.constant 1.000000e+00 : f32
    %136 = vector.broadcast %cst_27 : f32 to vector<8x128xf32>
    %137 = arith.addf %136, %135 : vector<8x128xf32>
    %138 = arith.divf %136, %137 : vector<8x128xf32>
    %139 = vector.extract_strided_slice %129 {offsets = [0, 128], sizes = [8, 128], strides = [1, 1]} : vector<8x384xf32> to vector<8x128xf32>
    %140 = vector.extract_strided_slice %130 {offsets = [0, 128], sizes = [8, 128], strides = [1, 1]} : vector<8x384xf32> to vector<8x128xf32>
    %141 = arith.addf %139, %140 : vector<8x128xf32>
    %142 = arith.negf %141 : vector<8x128xf32>
    %143 = math.exp %142 : vector<8x128xf32>
    %cst_28 = arith.constant 1.000000e+00 : f32
    %144 = vector.broadcast %cst_28 : f32 to vector<8x128xf32>
    %145 = arith.addf %144, %143 : vector<8x128xf32>
    %146 = arith.divf %144, %145 : vector<8x128xf32>
    %147 = vector.extract_strided_slice %129 {offsets = [0, 256], sizes = [8, 128], strides = [1, 1]} : vector<8x384xf32> to vector<8x128xf32>
    %148 = vector.extract_strided_slice %130 {offsets = [0, 256], sizes = [8, 128], strides = [1, 1]} : vector<8x384xf32> to vector<8x128xf32>
    %149 = vector.broadcast %7 : vector<1x128xf32> to vector<8x128xf32>
    %150 = arith.addf %148, %149 : vector<8x128xf32>
    %151 = arith.mulf %138, %150 : vector<8x128xf32>
    %152 = arith.addf %147, %151 : vector<8x128xf32>
    %153 = math.tanh %152 : vector<8x128xf32>
    %cst_29 = arith.constant 1.000000e+00 : f32
    %154 = vector.broadcast %cst_29 : f32 to vector<8x128xf32>
    %155 = arith.subf %154, %146 : vector<8x128xf32>
    %156 = arith.mulf %155, %153 : vector<8x128xf32>
    %157 = arith.mulf %146, %128 : vector<8x128xf32>
    %158 = arith.addf %156, %157 : vector<8x128xf32>
    %159 = vector.extract_strided_slice %5 {offsets = [40, 0], sizes = [8, 384], strides = [1, 1]} : vector<64x384xf32> to vector<8x384xf32>
    %cst_30 = arith.constant dense<0.000000e+00> : vector<8x384xf32>
    %160 = tpu.matmul %158, %6, %cst_30 {dimension_numbers = #tpu.dot_dimension_numbers<[1], [0], [0], [1], [0, 0, 1, 1], [], []>} : vector<8x128xf32>, vector<128x384xf32>, vector<8x384xf32> -> vector<8x384xf32>
    %161 = vector.extract_strided_slice %159 {offsets = [0, 0], sizes = [8, 128], strides = [1, 1]} : vector<8x384xf32> to vector<8x128xf32>
    %162 = vector.extract_strided_slice %160 {offsets = [0, 0], sizes = [8, 128], strides = [1, 1]} : vector<8x384xf32> to vector<8x128xf32>
    %163 = arith.addf %161, %162 : vector<8x128xf32>
    %164 = arith.negf %163 : vector<8x128xf32>
    %165 = math.exp %164 : vector<8x128xf32>
    %cst_31 = arith.constant 1.000000e+00 : f32
    %166 = vector.broadcast %cst_31 : f32 to vector<8x128xf32>
    %167 = arith.addf %166, %165 : vector<8x128xf32>
    %168 = arith.divf %166, %167 : vector<8x128xf32>
    %169 = vector.extract_strided_slice %159 {offsets = [0, 128], sizes = [8, 128], strides = [1, 1]} : vector<8x384xf32> to vector<8x128xf32>
    %170 = vector.extract_strided_slice %160 {offsets = [0, 128], sizes = [8, 128], strides = [1, 1]} : vector<8x384xf32> to vector<8x128xf32>
    %171 = arith.addf %169, %170 : vector<8x128xf32>
    %172 = arith.negf %171 : vector<8x128xf32>
    %173 = math.exp %172 : vector<8x128xf32>
    %cst_32 = arith.constant 1.000000e+00 : f32
    %174 = vector.broadcast %cst_32 : f32 to vector<8x128xf32>
    %175 = arith.addf %174, %173 : vector<8x128xf32>
    %176 = arith.divf %174, %175 : vector<8x128xf32>
    %177 = vector.extract_strided_slice %159 {offsets = [0, 256], sizes = [8, 128], strides = [1, 1]} : vector<8x384xf32> to vector<8x128xf32>
    %178 = vector.extract_strided_slice %160 {offsets = [0, 256], sizes = [8, 128], strides = [1, 1]} : vector<8x384xf32> to vector<8x128xf32>
    %179 = vector.broadcast %7 : vector<1x128xf32> to vector<8x128xf32>
    %180 = arith.addf %178, %179 : vector<8x128xf32>
    %181 = arith.mulf %168, %180 : vector<8x128xf32>
    %182 = arith.addf %177, %181 : vector<8x128xf32>
    %183 = math.tanh %182 : vector<8x128xf32>
    %cst_33 = arith.constant 1.000000e+00 : f32
    %184 = vector.broadcast %cst_33 : f32 to vector<8x128xf32>
    %185 = arith.subf %184, %176 : vector<8x128xf32>
    %186 = arith.mulf %185, %183 : vector<8x128xf32>
    %187 = arith.mulf %176, %158 : vector<8x128xf32>
    %188 = arith.addf %186, %187 : vector<8x128xf32>
    %189 = vector.extract_strided_slice %5 {offsets = [48, 0], sizes = [8, 384], strides = [1, 1]} : vector<64x384xf32> to vector<8x384xf32>
    %cst_34 = arith.constant dense<0.000000e+00> : vector<8x384xf32>
    %190 = tpu.matmul %188, %6, %cst_34 {dimension_numbers = #tpu.dot_dimension_numbers<[1], [0], [0], [1], [0, 0, 1, 1], [], []>} : vector<8x128xf32>, vector<128x384xf32>, vector<8x384xf32> -> vector<8x384xf32>
    %191 = vector.extract_strided_slice %189 {offsets = [0, 0], sizes = [8, 128], strides = [1, 1]} : vector<8x384xf32> to vector<8x128xf32>
    %192 = vector.extract_strided_slice %190 {offsets = [0, 0], sizes = [8, 128], strides = [1, 1]} : vector<8x384xf32> to vector<8x128xf32>
    %193 = arith.addf %191, %192 : vector<8x128xf32>
    %194 = arith.negf %193 : vector<8x128xf32>
    %195 = math.exp %194 : vector<8x128xf32>
    %cst_35 = arith.constant 1.000000e+00 : f32
    %196 = vector.broadcast %cst_35 : f32 to vector<8x128xf32>
    %197 = arith.addf %196, %195 : vector<8x128xf32>
    %198 = arith.divf %196, %197 : vector<8x128xf32>
    %199 = vector.extract_strided_slice %189 {offsets = [0, 128], sizes = [8, 128], strides = [1, 1]} : vector<8x384xf32> to vector<8x128xf32>
    %200 = vector.extract_strided_slice %190 {offsets = [0, 128], sizes = [8, 128], strides = [1, 1]} : vector<8x384xf32> to vector<8x128xf32>
    %201 = arith.addf %199, %200 : vector<8x128xf32>
    %202 = arith.negf %201 : vector<8x128xf32>
    %203 = math.exp %202 : vector<8x128xf32>
    %cst_36 = arith.constant 1.000000e+00 : f32
    %204 = vector.broadcast %cst_36 : f32 to vector<8x128xf32>
    %205 = arith.addf %204, %203 : vector<8x128xf32>
    %206 = arith.divf %204, %205 : vector<8x128xf32>
    %207 = vector.extract_strided_slice %189 {offsets = [0, 256], sizes = [8, 128], strides = [1, 1]} : vector<8x384xf32> to vector<8x128xf32>
    %208 = vector.extract_strided_slice %190 {offsets = [0, 256], sizes = [8, 128], strides = [1, 1]} : vector<8x384xf32> to vector<8x128xf32>
    %209 = vector.broadcast %7 : vector<1x128xf32> to vector<8x128xf32>
    %210 = arith.addf %208, %209 : vector<8x128xf32>
    %211 = arith.mulf %198, %210 : vector<8x128xf32>
    %212 = arith.addf %207, %211 : vector<8x128xf32>
    %213 = math.tanh %212 : vector<8x128xf32>
    %cst_37 = arith.constant 1.000000e+00 : f32
    %214 = vector.broadcast %cst_37 : f32 to vector<8x128xf32>
    %215 = arith.subf %214, %206 : vector<8x128xf32>
    %216 = arith.mulf %215, %213 : vector<8x128xf32>
    %217 = arith.mulf %206, %188 : vector<8x128xf32>
    %218 = arith.addf %216, %217 : vector<8x128xf32>
    %219 = vector.extract_strided_slice %5 {offsets = [56, 0], sizes = [8, 384], strides = [1, 1]} : vector<64x384xf32> to vector<8x384xf32>
    %cst_38 = arith.constant dense<0.000000e+00> : vector<8x384xf32>
    %220 = tpu.matmul %218, %6, %cst_38 {dimension_numbers = #tpu.dot_dimension_numbers<[1], [0], [0], [1], [0, 0, 1, 1], [], []>} : vector<8x128xf32>, vector<128x384xf32>, vector<8x384xf32> -> vector<8x384xf32>
    %221 = vector.extract_strided_slice %219 {offsets = [0, 0], sizes = [8, 128], strides = [1, 1]} : vector<8x384xf32> to vector<8x128xf32>
    %222 = vector.extract_strided_slice %220 {offsets = [0, 0], sizes = [8, 128], strides = [1, 1]} : vector<8x384xf32> to vector<8x128xf32>
    %223 = arith.addf %221, %222 : vector<8x128xf32>
    %224 = arith.negf %223 : vector<8x128xf32>
    %225 = math.exp %224 : vector<8x128xf32>
    %cst_39 = arith.constant 1.000000e+00 : f32
    %226 = vector.broadcast %cst_39 : f32 to vector<8x128xf32>
    %227 = arith.addf %226, %225 : vector<8x128xf32>
    %228 = arith.divf %226, %227 : vector<8x128xf32>
    %229 = vector.extract_strided_slice %219 {offsets = [0, 128], sizes = [8, 128], strides = [1, 1]} : vector<8x384xf32> to vector<8x128xf32>
    %230 = vector.extract_strided_slice %220 {offsets = [0, 128], sizes = [8, 128], strides = [1, 1]} : vector<8x384xf32> to vector<8x128xf32>
    %231 = arith.addf %229, %230 : vector<8x128xf32>
    %232 = arith.negf %231 : vector<8x128xf32>
    %233 = math.exp %232 : vector<8x128xf32>
    %cst_40 = arith.constant 1.000000e+00 : f32
    %234 = vector.broadcast %cst_40 : f32 to vector<8x128xf32>
    %235 = arith.addf %234, %233 : vector<8x128xf32>
    %236 = arith.divf %234, %235 : vector<8x128xf32>
    %237 = vector.extract_strided_slice %219 {offsets = [0, 256], sizes = [8, 128], strides = [1, 1]} : vector<8x384xf32> to vector<8x128xf32>
    %238 = vector.extract_strided_slice %220 {offsets = [0, 256], sizes = [8, 128], strides = [1, 1]} : vector<8x384xf32> to vector<8x128xf32>
    %239 = vector.broadcast %7 : vector<1x128xf32> to vector<8x128xf32>
    %240 = arith.addf %238, %239 : vector<8x128xf32>
    %241 = arith.mulf %228, %240 : vector<8x128xf32>
    %242 = arith.addf %237, %241 : vector<8x128xf32>
    %243 = math.tanh %242 : vector<8x128xf32>
    %cst_41 = arith.constant 1.000000e+00 : f32
    %244 = vector.broadcast %cst_41 : f32 to vector<8x128xf32>
    %245 = arith.subf %244, %236 : vector<8x128xf32>
    %246 = arith.mulf %245, %243 : vector<8x128xf32>
    %247 = arith.mulf %236, %218 : vector<8x128xf32>
    %248 = arith.addf %246, %247 : vector<8x128xf32>
    %249 = math.tanh %248 : vector<8x128xf32>
    %c0_42 = arith.constant 0 : index
    %c0_43 = arith.constant 0 : index
    %250 = vector.load %arg5[%c0_42, %c0_43] : memref<128x256xf32, #tpu.memory_space<vmem>>, vector<128x256xf32>
    %cst_44 = arith.constant dense<0.000000e+00> : vector<8x256xf32>
    %251 = tpu.matmul %249, %250, %cst_44 {dimension_numbers = #tpu.dot_dimension_numbers<[1], [0], [0], [1], [0, 0, 1, 1], [], []>} : vector<8x128xf32>, vector<128x256xf32>, vector<8x256xf32> -> vector<8x256xf32>
    %c0_45 = arith.constant 0 : index
    %c0_46 = arith.constant 0 : index
    %252 = vector.load %arg6[%c0_45, %c0_46] : memref<1x256xf32, #tpu.memory_space<vmem>>, vector<1x256xf32>
    %253 = vector.broadcast %252 : vector<1x256xf32> to vector<8x256xf32>
    %254 = arith.addf %251, %253 : vector<8x256xf32>
    %c0_47 = arith.constant 0 : index
    %c0_48 = arith.constant 0 : index
    %255 = vector.load %arg7[%c0_47, %c0_48] : memref<8x256xf32, #tpu.memory_space<vmem>>, vector<8x256xf32>
    tpu.vector_store %arg7[%c0_47, %c0_48], %254 {strides = array<i32>} : memref<8x256xf32, #tpu.memory_space<vmem>>, vector<8x256xf32>,
    return
  }
}

</mosaic_0001>

<llo_original>
// kernel: tpu_custom_call.1
$region0: #{tpu_custom_call.1}
  #allocation0 [shape = 'u32[]', space=smem, size = 0x4, offset = 0x4, fixed_abs, tag = 'smem constant byte address 0x4 - core index']
  #allocation1 [shape = 'u32[144,128]{1,0:T(1,128)}', space=vmem, size = 0x12000, scoped, tag = 'internal scratch']
  %s0 = inlined_call_operand.hbm [shape: f32[64,64], index: 0, kind: input, shape index: {}]
  %s1 = inlined_call_operand.hbm [shape: f32[64,384], index: 1, kind: input, shape index: {}]
  %s2 = inlined_call_operand.hbm [shape: f32[128,384], index: 2, kind: input, shape index: {}]
  %s3 = inlined_call_operand.vmem [shape: f32[1,384], index: 3, kind: input, shape index: {}]
  %s4 = inlined_call_operand.vmem [shape: f32[1,128], index: 4, kind: input, shape index: {}]
  %s5 = inlined_call_operand.hbm [shape: f32[128,256], index: 5, kind: input, shape index: {}]
  %s6 = inlined_call_operand.vmem [shape: f32[1,256], index: 6, kind: input, shape index: {}]
  %s7 = inlined_call_operand.hbm [shape: f32[8,256], index: 7, kind: output, shape index: {}]
  %s8 = sld [smem:[#allocation0]]
  $region54: #{tpu_custom_call.1} parent=0
    _
  %s10 = ssub.s32 1, %s8
  %s11 = scalar_select 0, %s10, %s8
  $region1: #{tpu_custom_call.1} parent=0
    #allocation2 [shape = 'u8[32768]{0}', space=vmem, size = 0x8000, scoped, tag = 'input window, operand 0, single buffered']
    #allocation3 [shape = 's32[1]{0}', space=sflag, size = 0x4, scoped, tag = 'scoped memory for tpu_custom_call.1']
    #allocation4 [shape = 's32[1]{0}', space=sflag, size = 0x4, scoped, tag = 'scoped memory for tpu_custom_call.1']
    #allocation5 [shape = 'u8[98304]{0}', space=vmem, size = 0x18000, scoped, tag = 'input window, operand 1, single buffered']
    #allocation6 [shape = 's32[1]{0}', space=sflag, size = 0x4, scoped, tag = 'scoped memory for tpu_custom_call.1']
    #allocation7 [shape = 'u8[196608]{0}', space=vmem, size = 0x30000, scoped, tag = 'input window, operand 2, single buffered']
    #allocation8 [shape = 'u8[131072]{0}', space=vmem, size = 0x20000, scoped, tag = 'input window, operand 5, single buffered']
    #allocation9 [shape = 's32[1]{0}', space=sflag, size = 0x4, scoped, tag = 'scoped memory for tpu_custom_call.1']
    #allocation10 [shape = 'u8[8192]{0}', space=vmem, size = 0x2000, scoped, tag = 'output window, operand 0, single buffered']
    %12 = vsyncpa [#allocation3], 0
    %13 = vsyncpa [#allocation6], 0
    %14 = vsyncpa [#allocation9], 0
    %15 = vsyncpa [#allocation4], 0
    // Predicated region
    $region2: #{tpu_custom_call.1} parent=1 // pred_check
      _
    $region3: #{tpu_custom_call.1} parent=1 // pred_check_branch
      %17 = sbr.rel (0) target = $region5
    $region4: #{tpu_custom_call.1} parent=1 // pred_region
      %s19 = ssub.s32 1024, 1024
      %20 = vsyncadd [#allocation3], %s19
      %s21 = sshll.u32 [#allocation2], 4
      %s22 = int_to_ptr.vmem [resolvable:$true] %s21
      %27 = dma.hbm_to_vmem [thread:$0]  %s0, 1024, %s22, [#allocation3], 128, 128, 8
    $region5: #{tpu_custom_call.1} parent=1 // pred_fallthru
      _
    // Predicated region
    $region6: #{tpu_custom_call.1} parent=1 // pred_check
      _
    $region7: #{tpu_custom_call.1} parent=1 // pred_check_branch
      %29 = sbr.rel (0) target = $region9
    $region8: #{tpu_custom_call.1} parent=1 // pred_region
      %s31 = ssub.s32 3072, 3072
      %32 = vsyncadd [#allocation6], %s31
      %s33 = sshll.u32 [#allocation5], 4
      %s34 = int_to_ptr.vmem [resolvable:$true] %s33
      %39 = dma.hbm_to_vmem [thread:$0]  %s1, 3072, %s34, [#allocation6], 384, 384, 24
    $region9: #{tpu_custom_call.1} parent=1 // pred_fallthru
      _
    // Predicated region
    $region10: #{tpu_custom_call.1} parent=1 // pred_check
      _
    $region11: #{tpu_custom_call.1} parent=1 // pred_check_branch
      %41 = sbr.rel (0) target = $region13
    $region12: #{tpu_custom_call.1} parent=1 // pred_region
      %s43 = ssub.s32 6144, 6144
      %44 = vsyncadd [#allocation6], %s43
      %s45 = sshll.u32 [#allocation7], 4
      %s46 = int_to_ptr.vmem [resolvable:$true] %s45
      %51 = dma.hbm_to_vmem [thread:$0]  %s2, 6144, %s46, [#allocation6], 384, 384, 24
    $region13: #{tpu_custom_call.1} parent=1 // pred_fallthru
      _
    // Predicated region
    $region14: #{tpu_custom_call.1} parent=1 // pred_check
      _
    $region15: #{tpu_custom_call.1} parent=1 // pred_check_branch
      %53 = sbr.rel (0) target = $region17
    $region16: #{tpu_custom_call.1} parent=1 // pred_region
      _
    $region17: #{tpu_custom_call.1} parent=1 // pred_fallthru
      _
    // Predicated region
    $region18: #{tpu_custom_call.1} parent=1 // pred_check
      _
    $region19: #{tpu_custom_call.1} parent=1 // pred_check_branch
      %55 = sbr.rel (0) target = $region21
    $region20: #{tpu_custom_call.1} parent=1 // pred_region
      _
    $region21: #{tpu_custom_call.1} parent=1 // pred_fallthru
      _
    // Predicated region
    $region22: #{tpu_custom_call.1} parent=1 // pred_check
      _
    $region23: #{tpu_custom_call.1} parent=1 // pred_check_branch
      %57 = sbr.rel (0) target = $region25
    $region24: #{tpu_custom_call.1} parent=1 // pred_region
      %s59 = ssub.s32 4096, 4096
      %60 = vsyncadd [#allocation9], %s59
      %s61 = sshll.u32 [#allocation8], 4
      %s62 = int_to_ptr.vmem [resolvable:$true] %s61
      %67 = dma.hbm_to_vmem [thread:$0]  %s5, 4096, %s62, [#allocation9], 256, 256, 16
    $region25: #{tpu_custom_call.1} parent=1 // pred_fallthru
      _
    // Predicated region
    $region26: #{tpu_custom_call.1} parent=1 // pred_check
      _
    $region27: #{tpu_custom_call.1} parent=1 // pred_check_branch
      %69 = sbr.rel (0) target = $region29
    $region28: #{tpu_custom_call.1} parent=1 // pred_region
      _
    $region29: #{tpu_custom_call.1} parent=1 // pred_fallthru
      _
    // Predicated region
    $region30: #{tpu_custom_call.1} parent=1 // pred_check
      _
    $region31: #{tpu_custom_call.1} parent=1 // pred_check_branch
      %71 = sbr.rel (0) target = $region33
    $region32: #{tpu_custom_call.1} parent=1 // pred_region
      %72 = dma.done [#allocation3], 1024
    $region33: #{tpu_custom_call.1} parent=1 // pred_fallthru
      _
    // Predicated region
    $region34: #{tpu_custom_call.1} parent=1 // pred_check
      _
    $region35: #{tpu_custom_call.1} parent=1 // pred_check_branch
      %74 = sbr.rel (0) target = $region37
    $region36: #{tpu_custom_call.1} parent=1 // pred_region
      %75 = dma.done [#allocation6], 3072
    $region37: #{tpu_custom_call.1} parent=1 // pred_fallthru
      _
    // Predicated region
    $region38: #{tpu_custom_call.1} parent=1 // pred_check
      _
    $region39: #{tpu_custom_call.1} parent=1 // pred_check_branch
      %77 = sbr.rel (0) target = $region41
    $region40: #{tpu_custom_call.1} parent=1 // pred_region
      %78 = dma.done [#allocation6], 6144
    $region41: #{tpu_custom_call.1} parent=1 // pred_fallthru
      _
    // Predicated region
    $region42: #{tpu_custom_call.1} parent=1 // pred_check
      _
    $region43: #{tpu_custom_call.1} parent=1 // pred_check_branch
      %80 = sbr.rel (0) target = $region45
    $region44: #{tpu_custom_call.1} parent=1 // pred_region
      %81 = dma.done [#allocation9], 4096
    $region45: #{tpu_custom_call.1} parent=1 // pred_fallthru
      _
    %v82 = vld [vmem:[#allocation2] sm:$0xff]
    %v83 = vld [vmem:[#allocation2 + $0x8] sm:$0xff]
    %v84 = vld [vmem:[#allocation2 + $0x10] sm:$0xff]
    %v85 = vld [vmem:[#allocation2 + $0x18] sm:$0xff]
    %v86 = vld [vmem:[#allocation2 + $0x20] sm:$0xff]
    %v87 = vld [vmem:[#allocation2 + $0x28] sm:$0xff]
    %v88 = vld [vmem:[#allocation2 + $0x30] sm:$0xff]
    %v89 = vld [vmem:[#allocation2 + $0x38] sm:$0xff]
    %v90 = vld [vmem:[#allocation5] sm:$0xff]
    %v91 = vld [vmem:[#allocation5 + $0x8] sm:$0xff]
    %v92 = vld [vmem:[#allocation5 + $0x10] sm:$0xff]
    %v93 = vld [vmem:[#allocation5 + $0x18] sm:$0xff]
    %v94 = vld [vmem:[#allocation5 + $0x20] sm:$0xff]
    %v95 = vld [vmem:[#allocation5 + $0x28] sm:$0xff]
    %v96 = vld [vmem:[#allocation5 + $0x30] sm:$0xff]
    %v97 = vld [vmem:[#allocation5 + $0x38] sm:$0xff]
    %v98 = vld [vmem:[#allocation5 + $0x40] sm:$0xff]
    %v99 = vld [vmem:[#allocation5 + $0x48] sm:$0xff]
    %v100 = vld [vmem:[#allocation5 + $0x50] sm:$0xff]
    %v101 = vld [vmem:[#allocation5 + $0x58] sm:$0xff]
    %v102 = vld [vmem:[#allocation5 + $0x60] sm:$0xff]
    %v103 = vld [vmem:[#allocation5 + $0x68] sm:$0xff]
    %v104 = vld [vmem:[#allocation5 + $0x70] sm:$0xff]
    %v105 = vld [vmem:[#allocation5 + $0x78] sm:$0xff]
    %v106 = vld [vmem:[#allocation5 + $0x80] sm:$0xff]
    %v107 = vld [vmem:[#allocation5 + $0x88] sm:$0xff]
    %v108 = vld [vmem:[#allocation5 + $0x90] sm:$0xff]
    %v109 = vld [vmem:[#allocation5 + $0x98] sm:$0xff]
    %v110 = vld [vmem:[#allocation5 + $0xa0] sm:$0xff]
    %v111 = vld [vmem:[#allocation5 + $0xa8] sm:$0xff]
    %v112 = vld [vmem:[#allocation5 + $0xb0] sm:$0xff]
    %v113 = vld [vmem:[#allocation5 + $0xb8] sm:$0xff]
    %v114 = vld [vmem:[%s3] sm:$0x7]
    %v116 = vlaneseq
    %v117 = vshrl.u32 %v116, 7
    %v118 = vsub.s32 0, %v117
    %v119 = vrot.slane %v114, %v118
    %v120 = vlaneseq
    %v121 = vshrl.u32 %v120, 7
    %v122 = vsub.s32 1, %v121
    %v123 = vrot.slane %v114, %v122
    %v124 = vlaneseq
    %v125 = vshrl.u32 %v124, 7
    %v126 = vsub.s32 2, %v125
    %v127 = vrot.slane %v114, %v126
    %vm131 = vcmask 523264
    %v133 = vsel %vm131, %v82, 0
    %v136 = vsel %vm131, %v83, 0
    %v139 = vsel %vm131, %v84, 0
    %v142 = vsel %vm131, %v85, 0
    %v145 = vsel %vm131, %v86, 0
    %v148 = vsel %vm131, %v87, 0
    %v151 = vsel %vm131, %v88, 0
    %v154 = vsel %vm131, %v89, 0
    %156 = vmatprep.subr.mxu0 %v91
    %157 = vmatpush1.msra.mxu0 %v90
    %158 = vmatprep.subr.mxu0 %v94
    %159 = vmatpush1.msra.mxu0 %v93
    %160 = vmatprep.subr.mxu0 %v97
    %161 = vmatpush1.msra.mxu0 %v96
    %162 = vmatprep.subr.mxu0 %v100
    %163 = vmatpush1.msra.mxu0 %v99
    %164 = vmatprep.subr.mxu0 %v103
    %165 = vmatpush1.msra.mxu0 %v102
    %166 = vmatprep.subr.mxu0 %v106
    %167 = vmatpush1.msra.mxu0 %v105
    %168 = vmatprep.subr.mxu0 %v109
    %169 = vmatpush1.msra.mxu0 %v108
    %170 = vmatprep.subr.mxu0 %v112
    %171 = vmatpush1.msra.mxu0 %v111
    %172 = vmatprep.subr.mxu0 0.0
    %173 = vmatpush1.msra.mxu0 0.0
    %174 = vmatprep.subr.mxu0 0.0
    %175 = vmatpush1.msra.mxu0 0.0
    %176 = vmatprep.subr.mxu0 0.0
    %177 = vmatpush1.msra.mxu0 0.0
    %178 = vmatprep.subr.mxu0 0.0
    %179 = vmatpush1.msra.mxu0 0.0
    %180 = vmatprep.subr.mxu0 0.0
    %181 = vmatpush1.msra.mxu0 0.0
    %182 = vmatprep.subr.mxu0 0.0
    %183 = vmatpush1.msra.mxu0 0.0
    %184 = vmatprep.subr.mxu0 0.0
    %185 = vmatpush1.msra.mxu0 0.0
    %186 = vmatprep.subr.mxu0 0.0
    %187 = vmatpush1.msra.mxu0 0.0
    %188 = vmatprep.subr.mxu0 0.0
    %189 = vmatpush1.msra.mxu0 0.0
    %190 = vmatprep.subr.mxu0 0.0
    %191 = vmatpush1.msra.mxu0 0.0
    %192 = vmatprep.subr.mxu0 0.0
    %193 = vmatpush1.msra.mxu0 0.0
    %194 = vmatprep.subr.mxu0 0.0
    %195 = vmatpush1.msra.mxu0 0.0
    %196 = vmatprep.subr.mxu0 0.0
    %197 = vmatpush1.msra.mxu0 0.0
    %198 = vmatprep.subr.mxu0 0.0
    %199 = vmatpush1.msra.mxu0 0.0
    %200 = vmatprep.subr.mxu0 0.0
    %201 = vmatpush1.msra.mxu0 0.0
    %202 = vmatprep.subr.mxu0 0.0
    %203 = vmatpush1.msra.mxu0 0.0
    %204 = vmatprep.subr.mxu0 0.0
    %205 = vmatpush1.msra.mxu0 0.0
    %206 = vmatprep.subr.mxu0 0.0
    %207 = vmatpush1.msra.mxu0 0.0
    %208 = vmatprep.subr.mxu0 0.0
    %209 = vmatpush1.msra.mxu0 0.0
    %210 = vmatprep.subr.mxu0 0.0
    %211 = vmatpush1.msra.mxu0 0.0
    %212 = vmatprep.subr.mxu0 0.0
    %213 = vmatpush1.msra.mxu0 0.0
    %214 = vmatprep.subr.mxu0 0.0
    %215 = vmatpush1.msra.mxu0 0.0
    %216 = vmatprep.subr.mxu0 0.0
    %217 = vmatpush1.msra.mxu0 0.0
    %218 = vmatprep.subr.mxu0 0.0
    %219 = vmatpush1.msra.mxu0 0.0
    %220 = vmatprep.mubr.f32.mxu0 0.0
    %221 = vmatmul.mubr.f32.gmra.mrb[0].mxu0 %v133
    %v222 = vpop.f32.mrb[0].mxu0
    %v223 = vadd.f32 %v119, %v222
    %v224 = vpop.f32.mrb[0].mxu0
    %v225 = vadd.f32 %v123, %v224
    %226 = vmatprep.mubr.f32.mxu0 0.0
    %227 = vmatmul.mubr.f32.gmra.mrb[0].mxu0 %v136
    %v228 = vpop.f32.mrb[0].mxu0
    %v229 = vadd.f32 %v119, %v228
    %v230 = vpop.f32.mrb[0].mxu0
    %v231 = vadd.f32 %v123, %v230
    %232 = vmatprep.mubr.f32.mxu0 0.0
    %233 = vmatmul.mubr.f32.gmra.mrb[0].mxu0 %v139
    %v234 = vpop.f32.mrb[0].mxu0
    %v235 = vadd.f32 %v119, %v234
    %v236 = vpop.f32.mrb[0].mxu0
    %v237 = vadd.f32 %v123, %v236
    %238 = vmatprep.mubr.f32.mxu0 0.0
    %239 = vmatmul.mubr.f32.gmra.mrb[0].mxu0 %v142
    %v240 = vpop.f32.mrb[0].mxu0
    %v241 = vadd.f32 %v119, %v240
    %v242 = vpop.f32.mrb[0].mxu0
    %v243 = vadd.f32 %v123, %v242
    %244 = vmatprep.mubr.f32.mxu0 0.0
    %245 = vmatmul.mubr.f32.gmra.mrb[0].mxu0 %v145
    %v246 = vpop.f32.mrb[0].mxu0
    %v247 = vadd.f32 %v119, %v246
    %v248 = vpop.f32.mrb[0].mxu0
    %v249 = vadd.f32 %v123, %v248
    %250 = vmatprep.mubr.f32.mxu0 0.0
    %251 = vmatmul.mubr.f32.gmra.mrb[0].mxu0 %v148
    %v252 = vpop.f32.mrb[0].mxu0
    %v253 = vadd.f32 %v119, %v252
    %v254 = vpop.f32.mrb[0].mxu0
    %v255 = vadd.f32 %v123, %v254
    %256 = vmatprep.mubr.f32.mxu0 0.0
    %257 = vmatmul.mubr.f32.gmra.mrb[0].mxu0 %v151
    %v258 = vpop.f32.mrb[0].mxu0
    %v259 = vadd.f32 %v119, %v258
    %v260 = vpop.f32.mrb[0].mxu0
    %v261 = vadd.f32 %v123, %v260
    %262 = vmatprep.mubr.f32.mxu0 0.0
    %263 = vmatmul.mubr.f32.gmra.mrb[0].mxu0 %v154
    %v264 = vpop.f32.mrb[0].mxu0
    %v265 = vadd.f32 %v119, %v264
    %v266 = vpop.f32.mrb[0].mxu0
    %v267 = vadd.f32 %v123, %v266
    %268 = vdwg.mxu0
    %269 = vmatprep.subr.mxu0 0.0
    %270 = vmatpush1.msra.mxu0 %v92
    %271 = vmatprep.subr.mxu0 0.0
    %272 = vmatpush1.msra.mxu0 %v95
    %273 = vmatprep.subr.mxu0 0.0
    %274 = vmatpush1.msra.mxu0 %v98
    %275 = vmatprep.subr.mxu0 0.0
    %276 = vmatpush1.msra.mxu0 %v101
    %277 = vmatprep.subr.mxu0 0.0
    %278 = vmatpush1.msra.mxu0 %v104
    %279 = vmatprep.subr.mxu0 0.0
    %280 = vmatpush1.msra.mxu0 %v107
    %281 = vmatprep.subr.mxu0 0.0
    %282 = vmatpush1.msra.mxu0 %v110
    %283 = vmatprep.subr.mxu0 0.0
    %284 = vmatpush1.msra.mxu0 %v113
    %285 = vmatprep.subr.mxu0 0.0
    %286 = vmatpush1.msra.mxu0 0.0
    %287 = vmatprep.subr.mxu0 0.0
    %288 = vmatpush1.msra.mxu0 0.0
    %289 = vmatprep.subr.mxu0 0.0
    %290 = vmatpush1.msra.mxu0 0.0
    %291 = vmatprep.subr.mxu0 0.0
    %292 = vmatpush1.msra.mxu0 0.0
    %293 = vmatprep.subr.mxu0 0.0
    %294 = vmatpush1.msra.mxu0 0.0
    %295 = vmatprep.subr.mxu0 0.0
    %296 = vmatpush1.msra.mxu0 0.0
    %297 = vmatprep.subr.mxu0 0.0
    %298 = vmatpush1.msra.mxu0 0.0
    %299 = vmatprep.subr.mxu0 0.0
    %300 = vmatpush1.msra.mxu0 0.0
    %301 = vmatprep.subr.mxu0 0.0
    %302 = vmatpush1.msra.mxu0 0.0
    %303 = vmatprep.subr.mxu0 0.0
    %304 = vmatpush1.msra.mxu0 0.0
    %305 = vmatprep.subr.mxu0 0.0
    %306 = vmatpush1.msra.mxu0 0.0
    %307 = vmatprep.subr.mxu0 0.0
    %308 = vmatpush1.msra.mxu0 0.0
    %309 = vmatprep.subr.mxu0 0.0
    %310 = vmatpush1.msra.mxu0 0.0
    %311 = vmatprep.subr.mxu0 0.0
    %312 = vmatpush1.msra.mxu0 0.0
    %313 = vmatprep.subr.mxu0 0.0
    %314 = vmatpush1.msra.mxu0 0.0
    %315 = vmatprep.subr.mxu0 0.0
    %316 = vmatpush1.msra.mxu0 0.0
    %317 = vmatprep.subr.mxu0 0.0
    %318 = vmatpush1.msra.mxu0 0.0
    %319 = vmatprep.subr.mxu0 0.0
    %320 = vmatpush1.msra.mxu0 0.0
    %321 = vmatprep.subr.mxu0 0.0
    %322 = vmatpush1.msra.mxu0 0.0
    %323 = vmatprep.subr.mxu0 0.0
    %324 = vmatpush1.msra.mxu0 0.0
    %325 = vmatprep.subr.mxu0 0.0
    %326 = vmatpush1.msra.mxu0 0.0
    %327 = vmatprep.subr.mxu0 0.0
    %328 = vmatpush1.msra.mxu0 0.0
    %329 = vmatprep.subr.mxu0 0.0
    %330 = vmatpush1.msra.mxu0 0.0
    %331 = vmatprep.subr.mxu0 0.0
    %332 = vmatpush1.msra.mxu0 0.0
    %333 = vmatprep.mubr.f32.mxu0 0.0
    %334 = vmatmul.mubr.f32.gmra.mrb[0].mxu0 %v133
    %v335 = vpop.f32.mrb[0].mxu0
    %v336 = vadd.f32 %v127, %v335
    %v337 = vpop.f32.mrb[0].mxu0
    %338 = vmatprep.mubr.f32.mxu0 0.0
    %339 = vmatmul.mubr.f32.gmra.mrb[0].mxu0 %v136
    %v340 = vpop.f32.mrb[0].mxu0
    %v341 = vadd.f32 %v127, %v340
    %v342 = vpop.f32.mrb[0].mxu0
    %343 = vmatprep.mubr.f32.mxu0 0.0
    %344 = vmatmul.mubr.f32.gmra.mrb[0].mxu0 %v139
    %v345 = vpop.f32.mrb[0].mxu0
    %v346 = vadd.f32 %v127, %v345
    %v347 = vpop.f32.mrb[0].mxu0
    %348 = vmatprep.mubr.f32.mxu0 0.0
    %349 = vmatmul.mubr.f32.gmra.mrb[0].mxu0 %v142
    %v350 = vpop.f32.mrb[0].mxu0
    %v351 = vadd.f32 %v127, %v350
    %v352 = vpop.f32.mrb[0].mxu0
    %353 = vmatprep.mubr.f32.mxu0 0.0
    %354 = vmatmul.mubr.f32.gmra.mrb[0].mxu0 %v145
    %v355 = vpop.f32.mrb[0].mxu0
    %v356 = vadd.f32 %v127, %v355
    %v357 = vpop.f32.mrb[0].mxu0
    %358 = vmatprep.mubr.f32.mxu0 0.0
    %359 = vmatmul.mubr.f32.gmra.mrb[0].mxu0 %v148
    %v360 = vpop.f32.mrb[0].mxu0
    %v361 = vadd.f32 %v127, %v360
    %v362 = vpop.f32.mrb[0].mxu0
    %363 = vmatprep.mubr.f32.mxu0 0.0
    %364 = vmatmul.mubr.f32.gmra.mrb[0].mxu0 %v151
    %v365 = vpop.f32.mrb[0].mxu0
    %v366 = vadd.f32 %v127, %v365
    %v367 = vpop.f32.mrb[0].mxu0
    %368 = vmatprep.mubr.f32.mxu0 0.0
    %369 = vmatmul.mubr.f32.gmra.mrb[0].mxu0 %v154
    %v370 = vpop.f32.mrb[0].mxu0
    %v371 = vadd.f32 %v127, %v370
    %v372 = vpop.f32.mrb[0].mxu0
    %373 = vdwg.mxu0
    %v374 = vld [vmem:[#allocation7] sm:$0xff]
    %v375 = vld [vmem:[#allocation7 + $0x8] sm:$0xff]
    %v376 = vld [vmem:[#allocation7 + $0x10] sm:$0xff]
    %v377 = vld [vmem:[#allocation7 + $0x18] sm:$0xff]
    %v378 = vld [vmem:[#allocation7 + $0x20] sm:$0xff]
    %v379 = vld [vmem:[#allocation7 + $0x28] sm:$0xff]
    %v380 = vld [vmem:[#allocation7 + $0x30] sm:$0xff]
    %v381 = vld [vmem:[#allocation7 + $0x38] sm:$0xff]
    %v382 = vld [vmem:[#allocation7 + $0x40] sm:$0xff]
    %v383 = vld [vmem:[#allocation7 + $0x48] sm:$0xff]
    %v384 = vld [vmem:[#allocation7 + $0x50] sm:$0xff]
    %v385 = vld [vmem:[#allocation7 + $0x58] sm:$0xff]
    %v386 = vld [vmem:[#allocation7 + $0x60] sm:$0xff]
    %v387 = vld [vmem:[#allocation7 + $0x68] sm:$0xff]
    %v388 = vld [vmem:[#allocation7 + $0x70] sm:$0xff]
    %v389 = vld [vmem:[#allocation7 + $0x78] sm:$0xff]
    %v390 = vld [vmem:[#allocation7 + $0x80] sm:$0xff]
    %v391 = vld [vmem:[#allocation7 + $0x88] sm:$0xff]
    %v392 = vld [vmem:[#allocation7 + $0x90] sm:$0xff]
    %v393 = vld [vmem:[#allocation7 + $0x98] sm:$0xff]
    %v394 = vld [vmem:[#allocation7 + $0xa0] sm:$0xff]
    %v395 = vld [vmem:[#allocation7 + $0xa8] sm:$0xff]
    %v396 = vld [vmem:[#allocation7 + $0xb0] sm:$0xff]
    %v397 = vld [vmem:[#allocation7 + $0xb8] sm:$0xff]
    %v398 = vld [vmem:[#allocation7 + $0xc0] sm:$0xff]
    %v399 = vld [vmem:[#allocation7 + $0xc8] sm:$0xff]
    %v400 = vld [vmem:[#allocation7 + $0xd0] sm:$0xff]
    %v401 = vld [vmem:[#allocation7 + $0xd8] sm:$0xff]
    %v402 = vld [vmem:[#allocation7 + $0xe0] sm:$0xff]
    %v403 = vld [vmem:[#allocation7 + $0xe8] sm:$0xff]
    %v404 = vld [vmem:[#allocation7 + $0xf0] sm:$0xff]
    %v405 = vld [vmem:[#allocation7 + $0xf8] sm:$0xff]
    %v406 = vld [vmem:[#allocation7 + $0x100] sm:$0xff]
    %v407 = vld [vmem:[#allocation7 + $0x108] sm:$0xff]
    %v408 = vld [vmem:[#allocation7 + $0x110] sm:$0xff]
    %v409 = vld [vmem:[#allocation7 + $0x118] sm:$0xff]
    %v410 = vld [vmem:[#allocation7 + $0x120] sm:$0xff]
    %v411 = vld [vmem:[#allocation7 + $0x128] sm:$0xff]
    %v412 = vld [vmem:[#allocation7 + $0x130] sm:$0xff]
    %v413 = vld [vmem:[#allocation7 + $0x138] sm:$0xff]
    %v414 = vld [vmem:[#allocation7 + $0x140] sm:$0xff]
    %v415 = vld [vmem:[#allocation7 + $0x148] sm:$0xff]
    %v416 = vld [vmem:[#allocation7 + $0x150] sm:$0xff]
    %v417 = vld [vmem:[#allocation7 + $0x158] sm:$0xff]
    %v418 = vld [vmem:[#allocation7 + $0x160] sm:$0xff]
    %v419 = vld [vmem:[#allocation7 + $0x168] sm:$0xff]
    %v420 = vld [vmem:[#allocation7 + $0x170] sm:$0xff]
    %v421 = vld [vmem:[#allocation7 + $0x178] sm:$0xff]
    %v422 = vld [vmem:[%s4] sm:$0x1]
    %423 = vmatprep.subr.mxu0 %v375
    %424 = vmatpush1.msra.mxu0 %v374
    %425 = vmatprep.subr.mxu0 %v378
    %426 = vmatpush1.msra.mxu0 %v377
    %427 = vmatprep.subr.mxu0 %v381
    %428 = vmatpush1.msra.mxu0 %v380
    %429 = vmatprep.subr.mxu0 %v384
    %430 = vmatpush1.msra.mxu0 %v383
    %431 = vmatprep.subr.mxu0 %v387
    %432 = vmatpush1.msra.mxu0 %v386
    %433 = vmatprep.subr.mxu0 %v390
    %434 = vmatpush1.msra.mxu0 %v389
    %435 = vmatprep.subr.mxu0 %v393
    %436 = vmatpush1.msra.mxu0 %v392
    %437 = vmatprep.subr.mxu0 %v396
    %438 = vmatpush1.msra.mxu0 %v395
    %439 = vmatprep.subr.mxu0 %v399
    %440 = vmatpush1.msra.mxu0 %v398
    %441 = vmatprep.subr.mxu0 %v402
    %442 = vmatpush1.msra.mxu0 %v401
    %443 = vmatprep.subr.mxu0 %v405
    %444 = vmatpush1.msra.mxu0 %v404
    %445 = vmatprep.subr.mxu0 %v408
    %446 = vmatpush1.msra.mxu0 %v407
    %447 = vmatprep.subr.mxu0 %v411
    %448 = vmatpush1.msra.mxu0 %v410
    %449 = vmatprep.subr.mxu0 %v414
    %450 = vmatpush1.msra.mxu0 %v413
    %451 = vmatprep.subr.mxu0 %v417
    %452 = vmatpush1.msra.mxu0 %v416
    %453 = vmatprep.subr.mxu0 %v420
    %454 = vmatpush1.msra.mxu0 %v419
    %455 = vmatprep.subr.mxu0 0.0
    %456 = vmatpush1.msra.mxu0 0.0
    %457 = vmatprep.subr.mxu0 0.0
    %458 = vmatpush1.msra.mxu0 0.0
    %459 = vmatprep.subr.mxu0 0.0
    %460 = vmatpush1.msra.mxu0 0.0
    %461 = vmatprep.subr.mxu0 0.0
    %462 = vmatpush1.msra.mxu0 0.0
    %463 = vmatprep.subr.mxu0 0.0
    %464 = vmatpush1.msra.mxu0 0.0
    %465 = vmatprep.subr.mxu0 0.0
    %466 = vmatpush1.msra.mxu0 0.0
    %467 = vmatprep.subr.mxu0 0.0
    %468 = vmatpush1.msra.mxu0 0.0
    %469 = vmatprep.subr.mxu0 0.0
    %470 = vmatpush1.msra.mxu0 0.0
    %471 = vmatprep.subr.mxu0 0.0
    %472 = vmatpush1.msra.mxu0 0.0
    %473 = vmatprep.subr.mxu0 0.0
    %474 = vmatpush1.msra.mxu0 0.0
    %475 = vmatprep.subr.mxu0 0.0
    %476 = vmatpush1.msra.mxu0 0.0
    %477 = vmatprep.subr.mxu0 0.0
    %478 = vmatpush1.msra.mxu0 0.0
    %479 = vmatprep.subr.mxu0 0.0
    %480 = vmatpush1.msra.mxu0 0.0
    %481 = vmatprep.subr.mxu0 0.0
    %482 = vmatpush1.msra.mxu0 0.0
    %483 = vmatprep.subr.mxu0 0.0
    %484 = vmatpush1.msra.mxu0 0.0
    %485 = vmatprep.subr.mxu0 0.0
    %486 = vmatpush1.msra.mxu0 0.0
    %487 = vmatprep.mubr.f32.mxu0 0.0
    %488 = vmatmul.mubr.f32.gmra.mrb[0].mxu0 0.0
    %v489 = vpop.f32.mrb[0].mxu0
    %v490 = vadd.f32 0.0, %v489
    %v491 = vpop.f32.mrb[0].mxu0
    %v492 = vadd.f32 0.0, %v491
    %493 = vdwg.mxu0
    %494 = vmatprep.subr.mxu0 0.0
    %495 = vmatpush1.msra.mxu0 %v376
    %496 = vmatprep.subr.mxu0 0.0
    %497 = vmatpush1.msra.mxu0 %v379
    %498 = vmatprep.subr.mxu0 0.0
    %499 = vmatpush1.msra.mxu0 %v382
    %500 = vmatprep.subr.mxu0 0.0
    %501 = vmatpush1.msra.mxu0 %v385
    %502 = vmatprep.subr.mxu0 0.0
    %503 = vmatpush1.msra.mxu0 %v388
    %504 = vmatprep.subr.mxu0 0.0
    %505 = vmatpush1.msra.mxu0 %v391
    %506 = vmatprep.subr.mxu0 0.0
    %507 = vmatpush1.msra.mxu0 %v394
    %508 = vmatprep.subr.mxu0 0.0
    %509 = vmatpush1.msra.mxu0 %v397
    %510 = vmatprep.subr.mxu0 0.0
    %511 = vmatpush1.msra.mxu0 %v400
    %512 = vmatprep.subr.mxu0 0.0
    %513 = vmatpush1.msra.mxu0 %v403
    %514 = vmatprep.subr.mxu0 0.0
    %515 = vmatpush1.msra.mxu0 %v406
    %516 = vmatprep.subr.mxu0 0.0
    %517 = vmatpush1.msra.mxu0 %v409
    %518 = vmatprep.subr.mxu0 0.0
    %519 = vmatpush1.msra.mxu0 %v412
    %520 = vmatprep.subr.mxu0 0.0
    %521 = vmatpush1.msra.mxu0 %v415
    %522 = vmatprep.subr.mxu0 0.0
    %523 = vmatpush1.msra.mxu0 %v418
    %524 = vmatprep.subr.mxu0 0.0
    %525 = vmatpush1.msra.mxu0 %v421
    %526 = vmatprep.subr.mxu0 0.0
    %527 = vmatpush1.msra.mxu0 0.0
    %528 = vmatprep.subr.mxu0 0.0
    %529 = vmatpush1.msra.mxu0 0.0
    %530 = vmatprep.subr.mxu0 0.0
    %531 = vmatpush1.msra.mxu0 0.0
    %532 = vmatprep.subr.mxu0 0.0
    %533 = vmatpush1.msra.mxu0 0.0
    %534 = vmatprep.subr.mxu0 0.0
    %535 = vmatpush1.msra.mxu0 0.0
    %536 = vmatprep.subr.mxu0 0.0
    %537 = vmatpush1.msra.mxu0 0.0
    %538 = vmatprep.subr.mxu0 0.0
    %539 = vmatpush1.msra.mxu0 0.0
    %540 = vmatprep.subr.mxu0 0.0
    %541 = vmatpush1.msra.mxu0 0.0
    %542 = vmatprep.subr.mxu0 0.0
    %543 = vmatpush1.msra.mxu0 0.0
    %544 = vmatprep.subr.mxu0 0.0
    %545 = vmatpush1.msra.mxu0 0.0
    %546 = vmatprep.subr.mxu0 0.0
    %547 = vmatpush1.msra.mxu0 0.0
    %548 = vmatprep.subr.mxu0 0.0
    %549 = vmatpush1.msra.mxu0 0.0
    %550 = vmatprep.subr.mxu0 0.0
    %551 = vmatpush1.msra.mxu0 0.0
    %552 = vmatprep.subr.mxu0 0.0
    %553 = vmatpush1.msra.mxu0 0.0
    %554 = vmatprep.subr.mxu0 0.0
    %555 = vmatpush1.msra.mxu0 0.0
    %556 = vmatprep.subr.mxu0 0.0
    %557 = vmatpush1.msra.mxu0 0.0
    %558 = vmatprep.mubr.f32.mxu0 0.0
    %559 = vmatmul.mubr.f32.gmra.mrb[0].mxu0 0.0
    %v560 = vpop.f32.mrb[0].mxu0
    %v561 = vadd.f32 0.0, %v560
    %v562 = vpop.f32.mrb[0].mxu0
    %563 = vdwg.mxu0
    %v564 = vadd.f32 %v223, %v490
    %v565 = vxor.u32 %v564, 2147483648
    %v566 = vmul.f32 %v565, 1.442695
    %v567 = vpow.pop %v566
    %v568 = vadd.f32 %v567, 1.0
    %v569 = vrcp.pop %v568
    %v570 = vmul.f32 1.0, %v569
    %v571 = vadd.f32 %v225, %v492
    %v572 = vxor.u32 %v571, 2147483648
    %v573 = vmul.f32 %v572, 1.442695
    %v574 = vpow.pop %v573
    %v575 = vadd.f32 %v574, 1.0
    %v576 = vrcp.pop %v575
    %v577 = vmul.f32 1.0, %v576
    %v579 = vlaneseq
    %v580 = vshrl.u32 %v579, 7
    %v581 = vsub.s32 0, %v580
    %v582 = vrot.slane %v422, %v581
    %v584 = vadd.f32 %v561, %v582
    %v585 = vmul.f32 %v570, %v584
    %v586 = vadd.f32 %v336, %v585
    %v587 = vtanh.pop %v586
    %v588 = vsub.f32 1.0, %v577
    %v589 = vmul.f32 %v588, %v587
    %v590 = vmul.f32 %v577, 0.0
    %v591 = vadd.f32 %v589, %v590
    %592 = vmatprep.subr.mxu0 %v375
    %593 = vmatpush1.msra.mxu0 %v374
    %594 = vmatprep.subr.mxu0 %v378
    %595 = vmatpush1.msra.mxu0 %v377
    %596 = vmatprep.subr.mxu0 %v381
    %597 = vmatpush1.msra.mxu0 %v380
    %598 = vmatprep.subr.mxu0 %v384
    %599 = vmatpush1.msra.mxu0 %v383
    %600 = vmatprep.subr.mxu0 %v387
    %601 = vmatpush1.msra.mxu0 %v386
    %602 = vmatprep.subr.mxu0 %v390
    %603 = vmatpush1.msra.mxu0 %v389
    %604 = vmatprep.subr.mxu0 %v393
    %605 = vmatpush1.msra.mxu0 %v392
    %606 = vmatprep.subr.mxu0 %v396
    %607 = vmatpush1.msra.mxu0 %v395
    %608 = vmatprep.subr.mxu0 %v399
    %609 = vmatpush1.msra.mxu0 %v398
    %610 = vmatprep.subr.mxu0 %v402
    %611 = vmatpush1.msra.mxu0 %v401
    %612 = vmatprep.subr.mxu0 %v405
    %613 = vmatpush1.msra.mxu0 %v404
    %614 = vmatprep.subr.mxu0 %v408
    %615 = vmatpush1.msra.mxu0 %v407
    %616 = vmatprep.subr.mxu0 %v411
    %617 = vmatpush1.msra.mxu0 %v410
    %618 = vmatprep.subr.mxu0 %v414
    %619 = vmatpush1.msra.mxu0 %v413
    %620 = vmatprep.subr.mxu0 %v417
    %621 = vmatpush1.msra.mxu0 %v416
    %622 = vmatprep.subr.mxu0 %v420
    %623 = vmatpush1.msra.mxu0 %v419
    %624 = vmatprep.subr.mxu0 0.0
    %625 = vmatpush1.msra.mxu0 0.0
    %626 = vmatprep.subr.mxu0 0.0
    %627 = vmatpush1.msra.mxu0 0.0
    %628 = vmatprep.subr.mxu0 0.0
    %629 = vmatpush1.msra.mxu0 0.0
    %630 = vmatprep.subr.mxu0 0.0
    %631 = vmatpush1.msra.mxu0 0.0
    %632 = vmatprep.subr.mxu0 0.0
    %633 = vmatpush1.msra.mxu0 0.0
    %634 = vmatprep.subr.mxu0 0.0
    %635 = vmatpush1.msra.mxu0 0.0
    %636 = vmatprep.subr.mxu0 0.0
    %637 = vmatpush1.msra.mxu0 0.0
    %638 = vmatprep.subr.mxu0 0.0
    %639 = vmatpush1.msra.mxu0 0.0
    %640 = vmatprep.subr.mxu0 0.0
    %641 = vmatpush1.msra.mxu0 0.0
    %642 = vmatprep.subr.mxu0 0.0
    %643 = vmatpush1.msra.mxu0 0.0
    %644 = vmatprep.subr.mxu0 0.0
    %645 = vmatpush1.msra.mxu0 0.0
    %646 = vmatprep.subr.mxu0 0.0
    %647 = vmatpush1.msra.mxu0 0.0
    %648 = vmatprep.subr.mxu0 0.0
    %649 = vmatpush1.msra.mxu0 0.0
    %650 = vmatprep.subr.mxu0 0.0
    %651 = vmatpush1.msra.mxu0 0.0
    %652 = vmatprep.subr.mxu0 0.0
    %653 = vmatpush1.msra.mxu0 0.0
    %654 = vmatprep.subr.mxu0 0.0
    %655 = vmatpush1.msra.mxu0 0.0
    %656 = vmatprep.mubr.f32.mxu0 0.0
    %657 = vmatmul.mubr.f32.gmra.mrb[0].mxu0 %v591
    %v658 = vpop.f32.mrb[0].mxu0
    %v659 = vadd.f32 0.0, %v658
    %v660 = vpop.f32.mrb[0].mxu0
    %v661 = vadd.f32 0.0, %v660
    %662 = vdwg.mxu0
    %663 = vmatprep.subr.mxu0 0.0
    %664 = vmatpush1.msra.mxu0 %v376
    %665 = vmatprep.subr.mxu0 0.0
    %666 = vmatpush1.msra.mxu0 %v379
    %667 = vmatprep.subr.mxu0 0.0
    %668 = vmatpush1.msra.mxu0 %v382
    %669 = vmatprep.subr.mxu0 0.0
    %670 = vmatpush1.msra.mxu0 %v385
    %671 = vmatprep.subr.mxu0 0.0
    %672 = vmatpush1.msra.mxu0 %v388
    %673 = vmatprep.subr.mxu0 0.0
    %674 = vmatpush1.msra.mxu0 %v391
    %675 = vmatprep.subr.mxu0 0.0
    %676 = vmatpush1.msra.mxu0 %v394
    %677 = vmatprep.subr.mxu0 0.0
    %678 = vmatpush1.msra.mxu0 %v397
    %679 = vmatprep.subr.mxu0 0.0
    %680 = vmatpush1.msra.mxu0 %v400
    %681 = vmatprep.subr.mxu0 0.0
    %682 = vmatpush1.msra.mxu0 %v403
    %683 = vmatprep.subr.mxu0 0.0
    %684 = vmatpush1.msra.mxu0 %v406
    %685 = vmatprep.subr.mxu0 0.0
    %686 = vmatpush1.msra.mxu0 %v409
    %687 = vmatprep.subr.mxu0 0.0
    %688 = vmatpush1.msra.mxu0 %v412
    %689 = vmatprep.subr.mxu0 0.0
    %690 = vmatpush1.msra.mxu0 %v415
    %691 = vmatprep.subr.mxu0 0.0
    %692 = vmatpush1.msra.mxu0 %v418
    %693 = vmatprep.subr.mxu0 0.0
    %694 = vmatpush1.msra.mxu0 %v421
    %695 = vmatprep.subr.mxu0 0.0
    %696 = vmatpush1.msra.mxu0 0.0
    %697 = vmatprep.subr.mxu0 0.0
    %698 = vmatpush1.msra.mxu0 0.0
    %699 = vmatprep.subr.mxu0 0.0
    %700 = vmatpush1.msra.mxu0 0.0
    %701 = vmatprep.subr.mxu0 0.0
    %702 = vmatpush1.msra.mxu0 0.0
    %703 = vmatprep.subr.mxu0 0.0
    %704 = vmatpush1.msra.mxu0 0.0
    %705 = vmatprep.subr.mxu0 0.0
    %706 = vmatpush1.msra.mxu0 0.0
    %707 = vmatprep.subr.mxu0 0.0
    %708 = vmatpush1.msra.mxu0 0.0
    %709 = vmatprep.subr.mxu0 0.0
    %710 = vmatpush1.msra.mxu0 0.0
    %711 = vmatprep.subr.mxu0 0.0
    %712 = vmatpush1.msra.mxu0 0.0
    %713 = vmatprep.subr.mxu0 0.0
    %714 = vmatpush1.msra.mxu0 0.0
    %715 = vmatprep.subr.mxu0 0.0
    %716 = vmatpush1.msra.mxu0 0.0
    %717 = vmatprep.subr.mxu0 0.0
    %718 = vmatpush1.msra.mxu0 0.0
    %719 = vmatprep.subr.mxu0 0.0
    %720 = vmatpush1.msra.mxu0 0.0
    %721 = vmatprep.subr.mxu0 0.0
    %722 = vmatpush1.msra.mxu0 0.0
    %723 = vmatprep.subr.mxu0 0.0
    %724 = vmatpush1.msra.mxu0 0.0
    %725 = vmatprep.subr.mxu0 0.0
    %726 = vmatpush1.msra.mxu0 0.0
    %727 = vmatprep.mubr.f32.mxu0 0.0
    %728 = vmatmul.mubr.f32.gmra.mrb[0].mxu0 %v591
    %v729 = vpop.f32.mrb[0].mxu0
    %v730 = vadd.f32 0.0, %v729
    %v731 = vpop.f32.mrb[0].mxu0
    %732 = vdwg.mxu0
    %v733 = vadd.f32 %v229, %v659
    %v734 = vxor.u32 %v733, 2147483648
    %v735 = vmul.f32 %v734, 1.442695
    %v736 = vpow.pop %v735
    %v737 = vadd.f32 %v736, 1.0
    %v738 = vrcp.pop %v737
    %v739 = vmul.f32 1.0, %v738
    %v740 = vadd.f32 %v231, %v661
    %v741 = vxor.u32 %v740, 2147483648
    %v742 = vmul.f32 %v741, 1.442695
    %v743 = vpow.pop %v742
    %v744 = vadd.f32 %v743, 1.0
    %v745 = vrcp.pop %v744
    %v746 = vmul.f32 1.0, %v745
    %v747 = vadd.f32 %v730, %v582
    %v748 = vmul.f32 %v739, %v747
    %v749 = vadd.f32 %v341, %v748
    %v750 = vtanh.pop %v749
    %v751 = vsub.f32 1.0, %v746
    %v752 = vmul.f32 %v751, %v750
    %v753 = vmul.f32 %v746, %v591
    %v754 = vadd.f32 %v752, %v753
    %755 = vmatprep.subr.mxu0 %v375
    %756 = vmatpush1.msra.mxu0 %v374
    %757 = vmatprep.subr.mxu0 %v378
    %758 = vmatpush1.msra.mxu0 %v377
    %759 = vmatprep.subr.mxu0 %v381
    %760 = vmatpush1.msra.mxu0 %v380
    %761 = vmatprep.subr.mxu0 %v384
    %762 = vmatpush1.msra.mxu0 %v383
    %763 = vmatprep.subr.mxu0 %v387
    %764 = vmatpush1.msra.mxu0 %v386
    %765 = vmatprep.subr.mxu0 %v390
    %766 = vmatpush1.msra.mxu0 %v389
    %767 = vmatprep.subr.mxu0 %v393
    %768 = vmatpush1.msra.mxu0 %v392
    %769 = vmatprep.subr.mxu0 %v396
    %770 = vmatpush1.msra.mxu0 %v395
    %771 = vmatprep.subr.mxu0 %v399
    %772 = vmatpush1.msra.mxu0 %v398
    %773 = vmatprep.subr.mxu0 %v402
    %774 = vmatpush1.msra.mxu0 %v401
    %775 = vmatprep.subr.mxu0 %v405
    %776 = vmatpush1.msra.mxu0 %v404
    %777 = vmatprep.subr.mxu0 %v408
    %778 = vmatpush1.msra.mxu0 %v407
    %779 = vmatprep.subr.mxu0 %v411
    %780 = vmatpush1.msra.mxu0 %v410
    %781 = vmatprep.subr.mxu0 %v414
    %782 = vmatpush1.msra.mxu0 %v413
    %783 = vmatprep.subr.mxu0 %v417
    %784 = vmatpush1.msra.mxu0 %v416
    %785 = vmatprep.subr.mxu0 %v420
    %786 = vmatpush1.msra.mxu0 %v419
    %787 = vmatprep.subr.mxu0 0.0
    %788 = vmatpush1.msra.mxu0 0.0
    %789 = vmatprep.subr.mxu0 0.0
    %790 = vmatpush1.msra.mxu0 0.0
    %791 = vmatprep.subr.mxu0 0.0
    %792 = vmatpush1.msra.mxu0 0.0
    %793 = vmatprep.subr.mxu0 0.0
    %794 = vmatpush1.msra.mxu0 0.0
    %795 = vmatprep.subr.mxu0 0.0
    %796 = vmatpush1.msra.mxu0 0.0
    %797 = vmatprep.subr.mxu0 0.0
    %798 = vmatpush1.msra.mxu0 0.0
    %799 = vmatprep.subr.mxu0 0.0
    %800 = vmatpush1.msra.mxu0 0.0
    %801 = vmatprep.subr.mxu0 0.0
    %802 = vmatpush1.msra.mxu0 0.0
    %803 = vmatprep.subr.mxu0 0.0
    %804 = vmatpush1.msra.mxu0 0.0
    %805 = vmatprep.subr.mxu0 0.0
    %806 = vmatpush1.msra.mxu0 0.0
    %807 = vmatprep.subr.mxu0 0.0
    %808 = vmatpush1.msra.mxu0 0.0
    %809 = vmatprep.subr.mxu0 0.0
    %810 = vmatpush1.msra.mxu0 0.0
    %811 = vmatprep.subr.mxu0 0.0
    %812 = vmatpush1.msra.mxu0 0.0
    %813 = vmatprep.subr.mxu0 0.0
    %814 = vmatpush1.msra.mxu0 0.0
    %815 = vmatprep.subr.mxu0 0.0
    %816 = vmatpush1.msra.mxu0 0.0
    %817 = vmatprep.subr.mxu0 0.0
    %818 = vmatpush1.msra.mxu0 0.0
    %819 = vmatprep.mubr.f32.mxu0 0.0
    %820 = vmatmul.mubr.f32.gmra.mrb[0].mxu0 %v754
    %v821 = vpop.f32.mrb[0].mxu0
    %v822 = vadd.f32 0.0, %v821
    %v823 = vpop.f32.mrb[0].mxu0
    %v824 = vadd.f32 0.0, %v823
    %825 = vdwg.mxu0
    %826 = vmatprep.subr.mxu0 0.0
    %827 = vmatpush1.msra.mxu0 %v376
    %828 = vmatprep.subr.mxu0 0.0
    %829 = vmatpush1.msra.mxu0 %v379
    %830 = vmatprep.subr.mxu0 0.0
    %831 = vmatpush1.msra.mxu0 %v382
    %832 = vmatprep.subr.mxu0 0.0
    %833 = vmatpush1.msra.mxu0 %v385
    %834 = vmatprep.subr.mxu0 0.0
    %835 = vmatpush1.msra.mxu0 %v388
    %836 = vmatprep.subr.mxu0 0.0
    %837 = vmatpush1.msra.mxu0 %v391
    %838 = vmatprep.subr.mxu0 0.0
    %839 = vmatpush1.msra.mxu0 %v394
    %840 = vmatprep.subr.mxu0 0.0
    %841 = vmatpush1.msra.mxu0 %v397
    %842 = vmatprep.subr.mxu0 0.0
    %843 = vmatpush1.msra.mxu0 %v400
    %844 = vmatprep.subr.mxu0 0.0
    %845 = vmatpush1.msra.mxu0 %v403
    %846 = vmatprep.subr.mxu0 0.0
    %847 = vmatpush1.msra.mxu0 %v406
    %848 = vmatprep.subr.mxu0 0.0
    %849 = vmatpush1.msra.mxu0 %v409
    %850 = vmatprep.subr.mxu0 0.0
    %851 = vmatpush1.msra.mxu0 %v412
    %852 = vmatprep.subr.mxu0 0.0
    %853 = vmatpush1.msra.mxu0 %v415
    %854 = vmatprep.subr.mxu0 0.0
    %855 = vmatpush1.msra.mxu0 %v418
    %856 = vmatprep.subr.mxu0 0.0
    %857 = vmatpush1.msra.mxu0 %v421
    %858 = vmatprep.subr.mxu0 0.0
    %859 = vmatpush1.msra.mxu0 0.0
    %860 = vmatprep.subr.mxu0 0.0
    %861 = vmatpush1.msra.mxu0 0.0
    %862 = vmatprep.subr.mxu0 0.0
    %863 = vmatpush1.msra.mxu0 0.0
    %864 = vmatprep.subr.mxu0 0.0
    %865 = vmatpush1.msra.mxu0 0.0
    %866 = vmatprep.subr.mxu0 0.0
    %867 = vmatpush1.msra.mxu0 0.0
    %868 = vmatprep.subr.mxu0 0.0
    %869 = vmatpush1.msra.mxu0 0.0
    %870 = vmatprep.subr.mxu0 0.0
    %871 = vmatpush1.msra.mxu0 0.0
    %872 = vmatprep.subr.mxu0 0.0
    %873 = vmatpush1.msra.mxu0 0.0
    %874 = vmatprep.subr.mxu0 0.0
    %875 = vmatpush1.msra.mxu0 0.0
    %876 = vmatprep.subr.mxu0 0.0
    %877 = vmatpush1.msra.mxu0 0.0
    %878 = vmatprep.subr.mxu0 0.0
    %879 = vmatpush1.msra.mxu0 0.0
    %880 = vmatprep.subr.mxu0 0.0
    %881 = vmatpush1.msra.mxu0 0.0
    %882 = vmatprep.subr.mxu0 0.0
    %883 = vmatpush1.msra.mxu0 0.0
    %884 = vmatprep.subr.mxu0 0.0
    %885 = vmatpush1.msra.mxu0 0.0
    %886 = vmatprep.subr.mxu0 0.0
    %887 = vmatpush1.msra.mxu0 0.0
    %888 = vmatprep.subr.mxu0 0.0
    %889 = vmatpush1.msra.mxu0 0.0
    %890 = vmatprep.mubr.f32.mxu0 0.0
    %891 = vmatmul.mubr.f32.gmra.mrb[0].mxu0 %v754
    %v892 = vpop.f32.mrb[0].mxu0
    %v893 = vadd.f32 0.0, %v892
    %v894 = vpop.f32.mrb[0].mxu0
    %895 = vdwg.mxu0
    %v896 = vadd.f32 %v235, %v822
    %v897 = vxor.u32 %v896, 2147483648
    %v898 = vmul.f32 %v897, 1.442695
    %v899 = vpow.pop %v898
    %v900 = vadd.f32 %v899, 1.0
    %v901 = vrcp.pop %v900
    %v902 = vmul.f32 1.0, %v901
    %v903 = vadd.f32 %v237, %v824
    %v904 = vxor.u32 %v903, 2147483648
    %v905 = vmul.f32 %v904, 1.442695
    %v906 = vpow.pop %v905
    %v907 = vadd.f32 %v906, 1.0
    %v908 = vrcp.pop %v907
    %v909 = vmul.f32 1.0, %v908
    %v910 = vadd.f32 %v893, %v582
    %v911 = vmul.f32 %v902, %v910
    %v912 = vadd.f32 %v346, %v911
    %v913 = vtanh.pop %v912
    %v914 = vsub.f32 1.0, %v909
    %v915 = vmul.f32 %v914, %v913
    %v916 = vmul.f32 %v909, %v754
    %v917 = vadd.f32 %v915, %v916
    %918 = vmatprep.subr.mxu0 %v375
    %919 = vmatpush1.msra.mxu0 %v374
    %920 = vmatprep.subr.mxu0 %v378
    %921 = vmatpush1.msra.mxu0 %v377
    %922 = vmatprep.subr.mxu0 %v381
    %923 = vmatpush1.msra.mxu0 %v380
    %924 = vmatprep.subr.mxu0 %v384
    %925 = vmatpush1.msra.mxu0 %v383
    %926 = vmatprep.subr.mxu0 %v387
    %927 = vmatpush1.msra.mxu0 %v386
    %928 = vmatprep.subr.mxu0 %v390
    %929 = vmatpush1.msra.mxu0 %v389
    %930 = vmatprep.subr.mxu0 %v393
    %931 = vmatpush1.msra.mxu0 %v392
    %932 = vmatprep.subr.mxu0 %v396
    %933 = vmatpush1.msra.mxu0 %v395
    %934 = vmatprep.subr.mxu0 %v399
    %935 = vmatpush1.msra.mxu0 %v398
    %936 = vmatprep.subr.mxu0 %v402
    %937 = vmatpush1.msra.mxu0 %v401
    %938 = vmatprep.subr.mxu0 %v405
    %939 = vmatpush1.msra.mxu0 %v404
    %940 = vmatprep.subr.mxu0 %v408
    %941 = vmatpush1.msra.mxu0 %v407
    %942 = vmatprep.subr.mxu0 %v411
    %943 = vmatpush1.msra.mxu0 %v410
    %944 = vmatprep.subr.mxu0 %v414
    %945 = vmatpush1.msra.mxu0 %v413
    %946 = vmatprep.subr.mxu0 %v417
    %947 = vmatpush1.msra.mxu0 %v416
    %948 = vmatprep.subr.mxu0 %v420
    %949 = vmatpush1.msra.mxu0 %v419
    %950 = vmatprep.subr.mxu0 0.0
    %951 = vmatpush1.msra.mxu0 0.0
    %952 = vmatprep.subr.mxu0 0.0
    %953 = vmatpush1.msra.mxu0 0.0
    %954 = vmatprep.subr.mxu0 0.0
    %955 = vmatpush1.msra.mxu0 0.0
    %956 = vmatprep.subr.mxu0 0.0
    %957 = vmatpush1.msra.mxu0 0.0
    %958 = vmatprep.subr.mxu0 0.0
    %959 = vmatpush1.msra.mxu0 0.0
    %960 = vmatprep.subr.mxu0 0.0
    %961 = vmatpush1.msra.mxu0 0.0
    %962 = vmatprep.subr.mxu0 0.0
    %963 = vmatpush1.msra.mxu0 0.0
    %964 = vmatprep.subr.mxu0 0.0
    %965 = vmatpush1.msra.mxu0 0.0
    %966 = vmatprep.subr.mxu0 0.0
    %967 = vmatpush1.msra.mxu0 0.0
    %968 = vmatprep.subr.mxu0 0.0
    %969 = vmatpush1.msra.mxu0 0.0
    %970 = vmatprep.subr.mxu0 0.0
    %971 = vmatpush1.msra.mxu0 0.0
    %972 = vmatprep.subr.mxu0 0.0
    %973 = vmatpush1.msra.mxu0 0.0
    %974 = vmatprep.subr.mxu0 0.0
    %975 = vmatpush1.msra.mxu0 0.0
    %976 = vmatprep.subr.mxu0 0.0
    %977 = vmatpush1.msra.mxu0 0.0
    %978 = vmatprep.subr.mxu0 0.0
    %979 = vmatpush1.msra.mxu0 0.0
    %980 = vmatprep.subr.mxu0 0.0
    %981 = vmatpush1.msra.mxu0 0.0
    %982 = vmatprep.mubr.f32.mxu0 0.0
    %983 = vmatmul.mubr.f32.gmra.mrb[0].mxu0 %v917
    %v984 = vpop.f32.mrb[0].mxu0
    %v985 = vadd.f32 0.0, %v984
    %v986 = vpop.f32.mrb[0].mxu0
    %v987 = vadd.f32 0.0, %v986
    %988 = vdwg.mxu0
    %989 = vmatprep.subr.mxu0 0.0
    %990 = vmatpush1.msra.mxu0 %v376
    %991 = vmatprep.subr.mxu0 0.0
    %992 = vmatpush1.msra.mxu0 %v379
    %993 = vmatprep.subr.mxu0 0.0
    %994 = vmatpush1.msra.mxu0 %v382
    %995 = vmatprep.subr.mxu0 0.0
    %996 = vmatpush1.msra.mxu0 %v385
    %997 = vmatprep.subr.mxu0 0.0
    %998 = vmatpush1.msra.mxu0 %v388
    %999 = vmatprep.subr.mxu0 0.0
    %1000 = vmatpush1.msra.mxu0 %v391
    %1001 = vmatprep.subr.mxu0 0.0
    %1002 = vmatpush1.msra.mxu0 %v394
    %1003 = vmatprep.subr.mxu0 0.0
    %1004 = vmatpush1.msra.mxu0 %v397
    %1005 = vmatprep.subr.mxu0 0.0
    %1006 = vmatpush1.msra.mxu0 %v400
    %1007 = vmatprep.subr.mxu0 0.0
    %1008 = vmatpush1.msra.mxu0 %v403
    %1009 = vmatprep.subr.mxu0 0.0
    %1010 = vmatpush1.msra.mxu0 %v406
    %1011 = vmatprep.subr.mxu0 0.0
    %1012 = vmatpush1.msra.mxu0 %v409
    %1013 = vmatprep.subr.mxu0 0.0
    %1014 = vmatpush1.msra.mxu0 %v412
    %1015 = vmatprep.subr.mxu0 0.0
    %1016 = vmatpush1.msra.mxu0 %v415
    %1017 = vmatprep.subr.mxu0 0.0
    %1018 = vmatpush1.msra.mxu0 %v418
    %1019 = vmatprep.subr.mxu0 0.0
    %1020 = vmatpush1.msra.mxu0 %v421
    %1021 = vmatprep.subr.mxu0 0.0
    %1022 = vmatpush1.msra.mxu0 0.0
    %1023 = vmatprep.subr.mxu0 0.0
    %1024 = vmatpush1.msra.mxu0 0.0
    %1025 = vmatprep.subr.mxu0 0.0
    %1026 = vmatpush1.msra.mxu0 0.0
    %1027 = vmatprep.subr.mxu0 0.0
    %1028 = vmatpush1.msra.mxu0 0.0
    %1029 = vmatprep.subr.mxu0 0.0
    %1030 = vmatpush1.msra.mxu0 0.0
    %1031 = vmatprep.subr.mxu0 0.0
    %1032 = vmatpush1.msra.mxu0 0.0
    %1033 = vmatprep.subr.mxu0 0.0
    %1034 = vmatpush1.msra.mxu0 0.0
    %1035 = vmatprep.subr.mxu0 0.0
    %1036 = vmatpush1.msra.mxu0 0.0
    %1037 = vmatprep.subr.mxu0 0.0
    %1038 = vmatpush1.msra.mxu0 0.0
    %1039 = vmatprep.subr.mxu0 0.0
    %1040 = vmatpush1.msra.mxu0 0.0
    %1041 = vmatprep.subr.mxu0 0.0
    %1042 = vmatpush1.msra.mxu0 0.0
    %1043 = vmatprep.subr.mxu0 0.0
    %1044 = vmatpush1.msra.mxu0 0.0
    %1045 = vmatprep.subr.mxu0 0.0
    %1046 = vmatpush1.msra.mxu0 0.0
    %1047 = vmatprep.subr.mxu0 0.0
    %1048 = vmatpush1.msra.mxu0 0.0
    %1049 = vmatprep.subr.mxu0 0.0
    %1050 = vmatpush1.msra.mxu0 0.0
    %1051 = vmatprep.subr.mxu0 0.0
    %1052 = vmatpush1.msra.mxu0 0.0
    %1053 = vmatprep.mubr.f32.mxu0 0.0
    %1054 = vmatmul.mubr.f32.gmra.mrb[0].mxu0 %v917
    %v1055 = vpop.f32.mrb[0].mxu0
    %v1056 = vadd.f32 0.0, %v1055
    %v1057 = vpop.f32.mrb[0].mxu0
    %1058 = vdwg.mxu0
    %v1059 = vadd.f32 %v241, %v985
    %v1060 = vxor.u32 %v1059, 2147483648
    %v1061 = vmul.f32 %v1060, 1.442695
    %v1062 = vpow.pop %v1061
    %v1063 = vadd.f32 %v1062, 1.0
    %v1064 = vrcp.pop %v1063
    %v1065 = vmul.f32 1.0, %v1064
    %v1066 = vadd.f32 %v243, %v987
    %v1067 = vxor.u32 %v1066, 2147483648
    %v1068 = vmul.f32 %v1067, 1.442695
    %v1069 = vpow.pop %v1068
    %v1070 = vadd.f32 %v1069, 1.0
    %v1071 = vrcp.pop %v1070
    %v1072 = vmul.f32 1.0, %v1071
    %v1073 = vadd.f32 %v1056, %v582
    %v1074 = vmul.f32 %v1065, %v1073
    %v1075 = vadd.f32 %v351, %v1074
    %v1076 = vtanh.pop %v1075
    %v1077 = vsub.f32 1.0, %v1072
    %v1078 = vmul.f32 %v1077, %v1076
    %v1079 = vmul.f32 %v1072, %v917
    %v1080 = vadd.f32 %v1078, %v1079
    %1081 = vmatprep.subr.mxu0 %v375
    %1082 = vmatpush1.msra.mxu0 %v374
    %1083 = vmatprep.subr.mxu0 %v378
    %1084 = vmatpush1.msra.mxu0 %v377
    %1085 = vmatprep.subr.mxu0 %v381
    %1086 = vmatpush1.msra.mxu0 %v380
    %1087 = vmatprep.subr.mxu0 %v384
    %1088 = vmatpush1.msra.mxu0 %v383
    %1089 = vmatprep.subr.mxu0 %v387
    %1090 = vmatpush1.msra.mxu0 %v386
    %1091 = vmatprep.subr.mxu0 %v390
    %1092 = vmatpush1.msra.mxu0 %v389
    %1093 = vmatprep.subr.mxu0 %v393
    %1094 = vmatpush1.msra.mxu0 %v392
    %1095 = vmatprep.subr.mxu0 %v396
    %1096 = vmatpush1.msra.mxu0 %v395
    %1097 = vmatprep.subr.mxu0 %v399
    %1098 = vmatpush1.msra.mxu0 %v398
    %1099 = vmatprep.subr.mxu0 %v402
    %1100 = vmatpush1.msra.mxu0 %v401
    %1101 = vmatprep.subr.mxu0 %v405
    %1102 = vmatpush1.msra.mxu0 %v404
    %1103 = vmatprep.subr.mxu0 %v408
    %1104 = vmatpush1.msra.mxu0 %v407
    %1105 = vmatprep.subr.mxu0 %v411
    %1106 = vmatpush1.msra.mxu0 %v410
    %1107 = vmatprep.subr.mxu0 %v414
    %1108 = vmatpush1.msra.mxu0 %v413
    %1109 = vmatprep.subr.mxu0 %v417
    %1110 = vmatpush1.msra.mxu0 %v416
    %1111 = vmatprep.subr.mxu0 %v420
    %1112 = vmatpush1.msra.mxu0 %v419
    %1113 = vmatprep.subr.mxu0 0.0
    %1114 = vmatpush1.msra.mxu0 0.0
    %1115 = vmatprep.subr.mxu0 0.0
    %1116 = vmatpush1.msra.mxu0 0.0
    %1117 = vmatprep.subr.mxu0 0.0
    %1118 = vmatpush1.msra.mxu0 0.0
    %1119 = vmatprep.subr.mxu0 0.0
    %1120 = vmatpush1.msra.mxu0 0.0
    %1121 = vmatprep.subr.mxu0 0.0
    %1122 = vmatpush1.msra.mxu0 0.0
    %1123 = vmatprep.subr.mxu0 0.0
    %1124 = vmatpush1.msra.mxu0 0.0
    %1125 = vmatprep.subr.mxu0 0.0
    %1126 = vmatpush1.msra.mxu0 0.0
    %1127 = vmatprep.subr.mxu0 0.0
    %1128 = vmatpush1.msra.mxu0 0.0
    %1129 = vmatprep.subr.mxu0 0.0
    %1130 = vmatpush1.msra.mxu0 0.0
    %1131 = vmatprep.subr.mxu0 0.0
    %1132 = vmatpush1.msra.mxu0 0.0
    %1133 = vmatprep.subr.mxu0 0.0
    %1134 = vmatpush1.msra.mxu0 0.0
    %1135 = vmatprep.subr.mxu0 0.0
    %1136 = vmatpush1.msra.mxu0 0.0
    %1137 = vmatprep.subr.mxu0 0.0
    %1138 = vmatpush1.msra.mxu0 0.0
    %1139 = vmatprep.subr.mxu0 0.0
    %1140 = vmatpush1.msra.mxu0 0.0
    %1141 = vmatprep.subr.mxu0 0.0
    %1142 = vmatpush1.msra.mxu0 0.0
    %1143 = vmatprep.subr.mxu0 0.0
    %1144 = vmatpush1.msra.mxu0 0.0
    %1145 = vmatprep.mubr.f32.mxu0 0.0
    %1146 = vmatmul.mubr.f32.gmra.mrb[0].mxu0 %v1080
    %v1147 = vpop.f32.mrb[0].mxu0
    %v1148 = vadd.f32 0.0, %v1147
    %v1149 = vpop.f32.mrb[0].mxu0
    %v1150 = vadd.f32 0.0, %v1149
    %1151 = vdwg.mxu0
    %1152 = vmatprep.subr.mxu0 0.0
    %1153 = vmatpush1.msra.mxu0 %v376
    %1154 = vmatprep.subr.mxu0 0.0
    %1155 = vmatpush1.msra.mxu0 %v379
    %1156 = vmatprep.subr.mxu0 0.0
    %1157 = vmatpush1.msra.mxu0 %v382
    %1158 = vmatprep.subr.mxu0 0.0
    %1159 = vmatpush1.msra.mxu0 %v385
    %1160 = vmatprep.subr.mxu0 0.0
    %1161 = vmatpush1.msra.mxu0 %v388
    %1162 = vmatprep.subr.mxu0 0.0
    %1163 = vmatpush1.msra.mxu0 %v391
    %1164 = vmatprep.subr.mxu0 0.0
    %1165 = vmatpush1.msra.mxu0 %v394
    %1166 = vmatprep.subr.mxu0 0.0
    %1167 = vmatpush1.msra.mxu0 %v397
    %1168 = vmatprep.subr.mxu0 0.0
    %1169 = vmatpush1.msra.mxu0 %v400
    %1170 = vmatprep.subr.mxu0 0.0
    %1171 = vmatpush1.msra.mxu0 %v403
    %1172 = vmatprep.subr.mxu0 0.0
    %1173 = vmatpush1.msra.mxu0 %v406
    %1174 = vmatprep.subr.mxu0 0.0
    %1175 = vmatpush1.msra.mxu0 %v409
    %1176 = vmatprep.subr.mxu0 0.0
    %1177 = vmatpush1.msra.mxu0 %v412
    %1178 = vmatprep.subr.mxu0 0.0
    %1179 = vmatpush1.msra.mxu0 %v415
    %1180 = vmatprep.subr.mxu0 0.0
    %1181 = vmatpush1.msra.mxu0 %v418
    %1182 = vmatprep.subr.mxu0 0.0
    %1183 = vmatpush1.msra.mxu0 %v421
    %1184 = vmatprep.subr.mxu0 0.0
    %1185 = vmatpush1.msra.mxu0 0.0
    %1186 = vmatprep.subr.mxu0 0.0
    %1187 = vmatpush1.msra.mxu0 0.0
    %1188 = vmatprep.subr.mxu0 0.0
    %1189 = vmatpush1.msra.mxu0 0.0
    %1190 = vmatprep.subr.mxu0 0.0
    %1191 = vmatpush1.msra.mxu0 0.0
    %1192 = vmatprep.subr.mxu0 0.0
    %1193 = vmatpush1.msra.mxu0 0.0
    %1194 = vmatprep.subr.mxu0 0.0
    %1195 = vmatpush1.msra.mxu0 0.0
    %1196 = vmatprep.subr.mxu0 0.0
    %1197 = vmatpush1.msra.mxu0 0.0
    %1198 = vmatprep.subr.mxu0 0.0
    %1199 = vmatpush1.msra.mxu0 0.0
    %1200 = vmatprep.subr.mxu0 0.0
    %1201 = vmatpush1.msra.mxu0 0.0
    %1202 = vmatprep.subr.mxu0 0.0
    %1203 = vmatpush1.msra.mxu0 0.0
    %1204 = vmatprep.subr.mxu0 0.0
    %1205 = vmatpush1.msra.mxu0 0.0
    %1206 = vmatprep.subr.mxu0 0.0
    %1207 = vmatpush1.msra.mxu0 0.0
    %1208 = vmatprep.subr.mxu0 0.0
    %1209 = vmatpush1.msra.mxu0 0.0
    %1210 = vmatprep.subr.mxu0 0.0
    %1211 = vmatpush1.msra.mxu0 0.0
    %1212 = vmatprep.subr.mxu0 0.0
    %1213 = vmatpush1.msra.mxu0 0.0
    %1214 = vmatprep.subr.mxu0 0.0
    %1215 = vmatpush1.msra.mxu0 0.0
    %1216 = vmatprep.mubr.f32.mxu0 0.0
    %1217 = vmatmul.mubr.f32.gmra.mrb[0].mxu0 %v1080
    %v1218 = vpop.f32.mrb[0].mxu0
    %v1219 = vadd.f32 0.0, %v1218
    %v1220 = vpop.f32.mrb[0].mxu0
    %1221 = vdwg.mxu0
    %v1222 = vadd.f32 %v247, %v1148
    %v1223 = vxor.u32 %v1222, 2147483648
    %v1224 = vmul.f32 %v1223, 1.442695
    %v1225 = vpow.pop %v1224
    %v1226 = vadd.f32 %v1225, 1.0
    %v1227 = vrcp.pop %v1226
    %v1228 = vmul.f32 1.0, %v1227
    %v1229 = vadd.f32 %v249, %v1150
    %v1230 = vxor.u32 %v1229, 2147483648
    %v1231 = vmul.f32 %v1230, 1.442695
    %v1232 = vpow.pop %v1231
    %v1233 = vadd.f32 %v1232, 1.0
    %v1234 = vrcp.pop %v1233
    %v1235 = vmul.f32 1.0, %v1234
    %v1236 = vadd.f32 %v1219, %v582
    %v1237 = vmul.f32 %v1228, %v1236
    %v1238 = vadd.f32 %v356, %v1237
    %v1239 = vtanh.pop %v1238
    %v1240 = vsub.f32 1.0, %v1235
    %v1241 = vmul.f32 %v1240, %v1239
    %v1242 = vmul.f32 %v1235, %v1080
    %v1243 = vadd.f32 %v1241, %v1242
    %1244 = vmatprep.subr.mxu0 %v375
    %1245 = vmatpush1.msra.mxu0 %v374
    %1246 = vmatprep.subr.mxu0 %v378
    %1247 = vmatpush1.msra.mxu0 %v377
    %1248 = vmatprep.subr.mxu0 %v381
    %1249 = vmatpush1.msra.mxu0 %v380
    %1250 = vmatprep.subr.mxu0 %v384
    %1251 = vmatpush1.msra.mxu0 %v383
    %1252 = vmatprep.subr.mxu0 %v387
    %1253 = vmatpush1.msra.mxu0 %v386
    %1254 = vmatprep.subr.mxu0 %v390
    %1255 = vmatpush1.msra.mxu0 %v389
    %1256 = vmatprep.subr.mxu0 %v393
    %1257 = vmatpush1.msra.mxu0 %v392
    %1258 = vmatprep.subr.mxu0 %v396
    %1259 = vmatpush1.msra.mxu0 %v395
    %1260 = vmatprep.subr.mxu0 %v399
    %1261 = vmatpush1.msra.mxu0 %v398
    %1262 = vmatprep.subr.mxu0 %v402
    %1263 = vmatpush1.msra.mxu0 %v401
    %1264 = vmatprep.subr.mxu0 %v405
    %1265 = vmatpush1.msra.mxu0 %v404
    %1266 = vmatprep.subr.mxu0 %v408
    %1267 = vmatpush1.msra.mxu0 %v407
    %1268 = vmatprep.subr.mxu0 %v411
    %1269 = vmatpush1.msra.mxu0 %v410
    %1270 = vmatprep.subr.mxu0 %v414
    %1271 = vmatpush1.msra.mxu0 %v413
    %1272 = vmatprep.subr.mxu0 %v417
    %1273 = vmatpush1.msra.mxu0 %v416
    %1274 = vmatprep.subr.mxu0 %v420
    %1275 = vmatpush1.msra.mxu0 %v419
    %1276 = vmatprep.subr.mxu0 0.0
    %1277 = vmatpush1.msra.mxu0 0.0
    %1278 = vmatprep.subr.mxu0 0.0
    %1279 = vmatpush1.msra.mxu0 0.0
    %1280 = vmatprep.subr.mxu0 0.0
    %1281 = vmatpush1.msra.mxu0 0.0
    %1282 = vmatprep.subr.mxu0 0.0
    %1283 = vmatpush1.msra.mxu0 0.0
    %1284 = vmatprep.subr.mxu0 0.0
    %1285 = vmatpush1.msra.mxu0 0.0
    %1286 = vmatprep.subr.mxu0 0.0
    %1287 = vmatpush1.msra.mxu0 0.0
    %1288 = vmatprep.subr.mxu0 0.0
    %1289 = vmatpush1.msra.mxu0 0.0
    %1290 = vmatprep.subr.mxu0 0.0
    %1291 = vmatpush1.msra.mxu0 0.0
    %1292 = vmatprep.subr.mxu0 0.0
    %1293 = vmatpush1.msra.mxu0 0.0
    %1294 = vmatprep.subr.mxu0 0.0
    %1295 = vmatpush1.msra.mxu0 0.0
    %1296 = vmatprep.subr.mxu0 0.0
    %1297 = vmatpush1.msra.mxu0 0.0
    %1298 = vmatprep.subr.mxu0 0.0
    %1299 = vmatpush1.msra.mxu0 0.0
    %1300 = vmatprep.subr.mxu0 0.0
    %1301 = vmatpush1.msra.mxu0 0.0
    %1302 = vmatprep.subr.mxu0 0.0
    %1303 = vmatpush1.msra.mxu0 0.0
    %1304 = vmatprep.subr.mxu0 0.0
    %1305 = vmatpush1.msra.mxu0 0.0
    %1306 = vmatprep.subr.mxu0 0.0
    %1307 = vmatpush1.msra.mxu0 0.0
    %1308 = vmatprep.mubr.f32.mxu0 0.0
    %1309 = vmatmul.mubr.f32.gmra.mrb[0].mxu0 %v1243
    %v1310 = vpop.f32.mrb[0].mxu0
    %v1311 = vadd.f32 0.0, %v1310
    %v1312 = vpop.f32.mrb[0].mxu0
    %v1313 = vadd.f32 0.0, %v1312
    %1314 = vdwg.mxu0
    %1315 = vmatprep.subr.mxu0 0.0
    %1316 = vmatpush1.msra.mxu0 %v376
    %1317 = vmatprep.subr.mxu0 0.0
    %1318 = vmatpush1.msra.mxu0 %v379
    %1319 = vmatprep.subr.mxu0 0.0
    %1320 = vmatpush1.msra.mxu0 %v382
    %1321 = vmatprep.subr.mxu0 0.0
    %1322 = vmatpush1.msra.mxu0 %v385
    %1323 = vmatprep.subr.mxu0 0.0
    %1324 = vmatpush1.msra.mxu0 %v388
    %1325 = vmatprep.subr.mxu0 0.0
    %1326 = vmatpush1.msra.mxu0 %v391
    %1327 = vmatprep.subr.mxu0 0.0
    %1328 = vmatpush1.msra.mxu0 %v394
    %1329 = vmatprep.subr.mxu0 0.0
    %1330 = vmatpush1.msra.mxu0 %v397
    %1331 = vmatprep.subr.mxu0 0.0
    %1332 = vmatpush1.msra.mxu0 %v400
    %1333 = vmatprep.subr.mxu0 0.0
    %1334 = vmatpush1.msra.mxu0 %v403
    %1335 = vmatprep.subr.mxu0 0.0
    %1336 = vmatpush1.msra.mxu0 %v406
    %1337 = vmatprep.subr.mxu0 0.0
    %1338 = vmatpush1.msra.mxu0 %v409
    %1339 = vmatprep.subr.mxu0 0.0
    %1340 = vmatpush1.msra.mxu0 %v412
    %1341 = vmatprep.subr.mxu0 0.0
    %1342 = vmatpush1.msra.mxu0 %v415
    %1343 = vmatprep.subr.mxu0 0.0
    %1344 = vmatpush1.msra.mxu0 %v418
    %1345 = vmatprep.subr.mxu0 0.0
    %1346 = vmatpush1.msra.mxu0 %v421
    %1347 = vmatprep.subr.mxu0 0.0
    %1348 = vmatpush1.msra.mxu0 0.0
    %1349 = vmatprep.subr.mxu0 0.0
    %1350 = vmatpush1.msra.mxu0 0.0
    %1351 = vmatprep.subr.mxu0 0.0
    %1352 = vmatpush1.msra.mxu0 0.0
    %1353 = vmatprep.subr.mxu0 0.0
    %1354 = vmatpush1.msra.mxu0 0.0
    %1355 = vmatprep.subr.mxu0 0.0
    %1356 = vmatpush1.msra.mxu0 0.0
    %1357 = vmatprep.subr.mxu0 0.0
    %1358 = vmatpush1.msra.mxu0 0.0
    %1359 = vmatprep.subr.mxu0 0.0
    %1360 = vmatpush1.msra.mxu0 0.0
    %1361 = vmatprep.subr.mxu0 0.0
    %1362 = vmatpush1.msra.mxu0 0.0
    %1363 = vmatprep.subr.mxu0 0.0
    %1364 = vmatpush1.msra.mxu0 0.0
    %1365 = vmatprep.subr.mxu0 0.0
    %1366 = vmatpush1.msra.mxu0 0.0
    %1367 = vmatprep.subr.mxu0 0.0
    %1368 = vmatpush1.msra.mxu0 0.0
    %1369 = vmatprep.subr.mxu0 0.0
    %1370 = vmatpush1.msra.mxu0 0.0
    %1371 = vmatprep.subr.mxu0 0.0
    %1372 = vmatpush1.msra.mxu0 0.0
    %1373 = vmatprep.subr.mxu0 0.0
    %1374 = vmatpush1.msra.mxu0 0.0
    %1375 = vmatprep.subr.mxu0 0.0
    %1376 = vmatpush1.msra.mxu0 0.0
    %1377 = vmatprep.subr.mxu0 0.0
    %1378 = vmatpush1.msra.mxu0 0.0
    %1379 = vmatprep.mubr.f32.mxu0 0.0
    %1380 = vmatmul.mubr.f32.gmra.mrb[0].mxu0 %v1243
    %v1381 = vpop.f32.mrb[0].mxu0
    %v1382 = vadd.f32 0.0, %v1381
    %v1383 = vpop.f32.mrb[0].mxu0
    %1384 = vdwg.mxu0
    %v1385 = vadd.f32 %v253, %v1311
    %v1386 = vxor.u32 %v1385, 2147483648
    %v1387 = vmul.f32 %v1386, 1.442695
    %v1388 = vpow.pop %v1387
    %v1389 = vadd.f32 %v1388, 1.0
    %v1390 = vrcp.pop %v1389
    %v1391 = vmul.f32 1.0, %v1390
    %v1392 = vadd.f32 %v255, %v1313
    %v1393 = vxor.u32 %v1392, 2147483648
    %v1394 = vmul.f32 %v1393, 1.442695
    %v1395 = vpow.pop %v1394
    %v1396 = vadd.f32 %v1395, 1.0
    %v1397 = vrcp.pop %v1396
    %v1398 = vmul.f32 1.0, %v1397
    %v1399 = vadd.f32 %v1382, %v582
    %v1400 = vmul.f32 %v1391, %v1399
    %v1401 = vadd.f32 %v361, %v1400
    %v1402 = vtanh.pop %v1401
    %v1403 = vsub.f32 1.0, %v1398
    %v1404 = vmul.f32 %v1403, %v1402
    %v1405 = vmul.f32 %v1398, %v1243
    %v1406 = vadd.f32 %v1404, %v1405
    %1407 = vmatprep.subr.mxu0 %v375
    %1408 = vmatpush1.msra.mxu0 %v374
    %1409 = vmatprep.subr.mxu0 %v378
    %1410 = vmatpush1.msra.mxu0 %v377
    %1411 = vmatprep.subr.mxu0 %v381
    %1412 = vmatpush1.msra.mxu0 %v380
    %1413 = vmatprep.subr.mxu0 %v384
    %1414 = vmatpush1.msra.mxu0 %v383
    %1415 = vmatprep.subr.mxu0 %v387
    %1416 = vmatpush1.msra.mxu0 %v386
    %1417 = vmatprep.subr.mxu0 %v390
    %1418 = vmatpush1.msra.mxu0 %v389
    %1419 = vmatprep.subr.mxu0 %v393
    %1420 = vmatpush1.msra.mxu0 %v392
    %1421 = vmatprep.subr.mxu0 %v396
    %1422 = vmatpush1.msra.mxu0 %v395
    %1423 = vmatprep.subr.mxu0 %v399
    %1424 = vmatpush1.msra.mxu0 %v398
    %1425 = vmatprep.subr.mxu0 %v402
    %1426 = vmatpush1.msra.mxu0 %v401
    %1427 = vmatprep.subr.mxu0 %v405
    %1428 = vmatpush1.msra.mxu0 %v404
    %1429 = vmatprep.subr.mxu0 %v408
    %1430 = vmatpush1.msra.mxu0 %v407
    %1431 = vmatprep.subr.mxu0 %v411
    %1432 = vmatpush1.msra.mxu0 %v410
    %1433 = vmatprep.subr.mxu0 %v414
    %1434 = vmatpush1.msra.mxu0 %v413
    %1435 = vmatprep.subr.mxu0 %v417
    %1436 = vmatpush1.msra.mxu0 %v416
    %1437 = vmatprep.subr.mxu0 %v420
    %1438 = vmatpush1.msra.mxu0 %v419
    %1439 = vmatprep.subr.mxu0 0.0
    %1440 = vmatpush1.msra.mxu0 0.0
    %1441 = vmatprep.subr.mxu0 0.0
    %1442 = vmatpush1.msra.mxu0 0.0
    %1443 = vmatprep.subr.mxu0 0.0
    %1444 = vmatpush1.msra.mxu0 0.0
    %1445 = vmatprep.subr.mxu0 0.0
    %1446 = vmatpush1.msra.mxu0 0.0
    %1447 = vmatprep.subr.mxu0 0.0
    %1448 = vmatpush1.msra.mxu0 0.0
    %1449 = vmatprep.subr.mxu0 0.0
    %1450 = vmatpush1.msra.mxu0 0.0
    %1451 = vmatprep.subr.mxu0 0.0
    %1452 = vmatpush1.msra.mxu0 0.0
    %1453 = vmatprep.subr.mxu0 0.0
    %1454 = vmatpush1.msra.mxu0 0.0
    %1455 = vmatprep.subr.mxu0 0.0
    %1456 = vmatpush1.msra.mxu0 0.0
    %1457 = vmatprep.subr.mxu0 0.0
    %1458 = vmatpush1.msra.mxu0 0.0
    %1459 = vmatprep.subr.mxu0 0.0
    %1460 = vmatpush1.msra.mxu0 0.0
    %1461 = vmatprep.subr.mxu0 0.0
    %1462 = vmatpush1.msra.mxu0 0.0
    %1463 = vmatprep.subr.mxu0 0.0
    %1464 = vmatpush1.msra.mxu0 0.0
    %1465 = vmatprep.subr.mxu0 0.0
    %1466 = vmatpush1.msra.mxu0 0.0
    %1467 = vmatprep.subr.mxu0 0.0
    %1468 = vmatpush1.msra.mxu0 0.0
    %1469 = vmatprep.subr.mxu0 0.0
    %1470 = vmatpush1.msra.mxu0 0.0
    %1471 = vmatprep.mubr.f32.mxu0 0.0
    %1472 = vmatmul.mubr.f32.gmra.mrb[0].mxu0 %v1406
    %v1473 = vpop.f32.mrb[0].mxu0
    %v1474 = vadd.f32 0.0, %v1473
    %v1475 = vpop.f32.mrb[0].mxu0
    %v1476 = vadd.f32 0.0, %v1475
    %1477 = vdwg.mxu0
    %1478 = vmatprep.subr.mxu0 0.0
    %1479 = vmatpush1.msra.mxu0 %v376
    %1480 = vmatprep.subr.mxu0 0.0
    %1481 = vmatpush1.msra.mxu0 %v379
    %1482 = vmatprep.subr.mxu0 0.0
    %1483 = vmatpush1.msra.mxu0 %v382
    %1484 = vmatprep.subr.mxu0 0.0
    %1485 = vmatpush1.msra.mxu0 %v385
    %1486 = vmatprep.subr.mxu0 0.0
    %1487 = vmatpush1.msra.mxu0 %v388
    %1488 = vmatprep.subr.mxu0 0.0
    %1489 = vmatpush1.msra.mxu0 %v391
    %1490 = vmatprep.subr.mxu0 0.0
    %1491 = vmatpush1.msra.mxu0 %v394
    %1492 = vmatprep.subr.mxu0 0.0
    %1493 = vmatpush1.msra.mxu0 %v397
    %1494 = vmatprep.subr.mxu0 0.0
    %1495 = vmatpush1.msra.mxu0 %v400
    %1496 = vmatprep.subr.mxu0 0.0
    %1497 = vmatpush1.msra.mxu0 %v403
    %1498 = vmatprep.subr.mxu0 0.0
    %1499 = vmatpush1.msra.mxu0 %v406
    %1500 = vmatprep.subr.mxu0 0.0
    %1501 = vmatpush1.msra.mxu0 %v409
    %1502 = vmatprep.subr.mxu0 0.0
    %1503 = vmatpush1.msra.mxu0 %v412
    %1504 = vmatprep.subr.mxu0 0.0
    %1505 = vmatpush1.msra.mxu0 %v415
    %1506 = vmatprep.subr.mxu0 0.0
    %1507 = vmatpush1.msra.mxu0 %v418
    %1508 = vmatprep.subr.mxu0 0.0
    %1509 = vmatpush1.msra.mxu0 %v421
    %1510 = vmatprep.subr.mxu0 0.0
    %1511 = vmatpush1.msra.mxu0 0.0
    %1512 = vmatprep.subr.mxu0 0.0
    %1513 = vmatpush1.msra.mxu0 0.0
    %1514 = vmatprep.subr.mxu0 0.0
    %1515 = vmatpush1.msra.mxu0 0.0
    %1516 = vmatprep.subr.mxu0 0.0
    %1517 = vmatpush1.msra.mxu0 0.0
    %1518 = vmatprep.subr.mxu0 0.0
    %1519 = vmatpush1.msra.mxu0 0.0
    %1520 = vmatprep.subr.mxu0 0.0
    %1521 = vmatpush1.msra.mxu0 0.0
    %1522 = vmatprep.subr.mxu0 0.0
    %1523 = vmatpush1.msra.mxu0 0.0
    %1524 = vmatprep.subr.mxu0 0.0
    %1525 = vmatpush1.msra.mxu0 0.0
    %1526 = vmatprep.subr.mxu0 0.0
    %1527 = vmatpush1.msra.mxu0 0.0
    %1528 = vmatprep.subr.mxu0 0.0
    %1529 = vmatpush1.msra.mxu0 0.0
    %1530 = vmatprep.subr.mxu0 0.0
    %1531 = vmatpush1.msra.mxu0 0.0
    %1532 = vmatprep.subr.mxu0 0.0
    %1533 = vmatpush1.msra.mxu0 0.0
    %1534 = vmatprep.subr.mxu0 0.0
    %1535 = vmatpush1.msra.mxu0 0.0
    %1536 = vmatprep.subr.mxu0 0.0
    %1537 = vmatpush1.msra.mxu0 0.0
    %1538 = vmatprep.subr.mxu0 0.0
    %1539 = vmatpush1.msra.mxu0 0.0
    %1540 = vmatprep.subr.mxu0 0.0
    %1541 = vmatpush1.msra.mxu0 0.0
    %1542 = vmatprep.mubr.f32.mxu0 0.0
    %1543 = vmatmul.mubr.f32.gmra.mrb[0].mxu0 %v1406
    %v1544 = vpop.f32.mrb[0].mxu0
    %v1545 = vadd.f32 0.0, %v1544
    %v1546 = vpop.f32.mrb[0].mxu0
    %1547 = vdwg.mxu0
    %v1548 = vadd.f32 %v259, %v1474
    %v1549 = vxor.u32 %v1548, 2147483648
    %v1550 = vmul.f32 %v1549, 1.442695
    %v1551 = vpow.pop %v1550
    %v1552 = vadd.f32 %v1551, 1.0
    %v1553 = vrcp.pop %v1552
    %v1554 = vmul.f32 1.0, %v1553
    %v1555 = vadd.f32 %v261, %v1476
    %v1556 = vxor.u32 %v1555, 2147483648
    %v1557 = vmul.f32 %v1556, 1.442695
    %v1558 = vpow.pop %v1557
    %v1559 = vadd.f32 %v1558, 1.0
    %v1560 = vrcp.pop %v1559
    %v1561 = vmul.f32 1.0, %v1560
    %v1562 = vadd.f32 %v1545, %v582
    %v1563 = vmul.f32 %v1554, %v1562
    %v1564 = vadd.f32 %v366, %v1563
    %v1565 = vtanh.pop %v1564
    %v1566 = vsub.f32 1.0, %v1561
    %v1567 = vmul.f32 %v1566, %v1565
    %v1568 = vmul.f32 %v1561, %v1406
    %v1569 = vadd.f32 %v1567, %v1568
    %1570 = vmatprep.subr.mxu0 %v375
    %1571 = vmatpush1.msra.mxu0 %v374
    %1572 = vmatprep.subr.mxu0 %v378
    %1573 = vmatpush1.msra.mxu0 %v377
    %1574 = vmatprep.subr.mxu0 %v381
    %1575 = vmatpush1.msra.mxu0 %v380
    %1576 = vmatprep.subr.mxu0 %v384
    %1577 = vmatpush1.msra.mxu0 %v383
    %1578 = vmatprep.subr.mxu0 %v387
    %1579 = vmatpush1.msra.mxu0 %v386
    %1580 = vmatprep.subr.mxu0 %v390
    %1581 = vmatpush1.msra.mxu0 %v389
    %1582 = vmatprep.subr.mxu0 %v393
    %1583 = vmatpush1.msra.mxu0 %v392
    %1584 = vmatprep.subr.mxu0 %v396
    %1585 = vmatpush1.msra.mxu0 %v395
    %1586 = vmatprep.subr.mxu0 %v399
    %1587 = vmatpush1.msra.mxu0 %v398
    %1588 = vmatprep.subr.mxu0 %v402
    %1589 = vmatpush1.msra.mxu0 %v401
    %1590 = vmatprep.subr.mxu0 %v405
    %1591 = vmatpush1.msra.mxu0 %v404
    %1592 = vmatprep.subr.mxu0 %v408
    %1593 = vmatpush1.msra.mxu0 %v407
    %1594 = vmatprep.subr.mxu0 %v411
    %1595 = vmatpush1.msra.mxu0 %v410
    %1596 = vmatprep.subr.mxu0 %v414
    %1597 = vmatpush1.msra.mxu0 %v413
    %1598 = vmatprep.subr.mxu0 %v417
    %1599 = vmatpush1.msra.mxu0 %v416
    %1600 = vmatprep.subr.mxu0 %v420
    %1601 = vmatpush1.msra.mxu0 %v419
    %1602 = vmatprep.subr.mxu0 0.0
    %1603 = vmatpush1.msra.mxu0 0.0
    %1604 = vmatprep.subr.mxu0 0.0
    %1605 = vmatpush1.msra.mxu0 0.0
    %1606 = vmatprep.subr.mxu0 0.0
    %1607 = vmatpush1.msra.mxu0 0.0
    %1608 = vmatprep.subr.mxu0 0.0
    %1609 = vmatpush1.msra.mxu0 0.0
    %1610 = vmatprep.subr.mxu0 0.0
    %1611 = vmatpush1.msra.mxu0 0.0
    %1612 = vmatprep.subr.mxu0 0.0
    %1613 = vmatpush1.msra.mxu0 0.0
    %1614 = vmatprep.subr.mxu0 0.0
    %1615 = vmatpush1.msra.mxu0 0.0
    %1616 = vmatprep.subr.mxu0 0.0
    %1617 = vmatpush1.msra.mxu0 0.0
    %1618 = vmatprep.subr.mxu0 0.0
    %1619 = vmatpush1.msra.mxu0 0.0
    %1620 = vmatprep.subr.mxu0 0.0
    %1621 = vmatpush1.msra.mxu0 0.0
    %1622 = vmatprep.subr.mxu0 0.0
    %1623 = vmatpush1.msra.mxu0 0.0
    %1624 = vmatprep.subr.mxu0 0.0
    %1625 = vmatpush1.msra.mxu0 0.0
    %1626 = vmatprep.subr.mxu0 0.0
    %1627 = vmatpush1.msra.mxu0 0.0
    %1628 = vmatprep.subr.mxu0 0.0
    %1629 = vmatpush1.msra.mxu0 0.0
    %1630 = vmatprep.subr.mxu0 0.0
    %1631 = vmatpush1.msra.mxu0 0.0
    %1632 = vmatprep.subr.mxu0 0.0
    %1633 = vmatpush1.msra.mxu0 0.0
    %1634 = vmatprep.mubr.f32.mxu0 0.0
    %1635 = vmatmul.mubr.f32.gmra.mrb[0].mxu0 %v1569
    %v1636 = vpop.f32.mrb[0].mxu0
    %v1637 = vadd.f32 0.0, %v1636
    %v1638 = vpop.f32.mrb[0].mxu0
    %v1639 = vadd.f32 0.0, %v1638
    %1640 = vdwg.mxu0
    %1641 = vmatprep.subr.mxu0 0.0
    %1642 = vmatpush1.msra.mxu0 %v376
    %1643 = vmatprep.subr.mxu0 0.0
    %1644 = vmatpush1.msra.mxu0 %v379
    %1645 = vmatprep.subr.mxu0 0.0
    %1646 = vmatpush1.msra.mxu0 %v382
    %1647 = vmatprep.subr.mxu0 0.0
    %1648 = vmatpush1.msra.mxu0 %v385
    %1649 = vmatprep.subr.mxu0 0.0
    %1650 = vmatpush1.msra.mxu0 %v388
    %1651 = vmatprep.subr.mxu0 0.0
    %1652 = vmatpush1.msra.mxu0 %v391
    %1653 = vmatprep.subr.mxu0 0.0
    %1654 = vmatpush1.msra.mxu0 %v394
    %1655 = vmatprep.subr.mxu0 0.0
    %1656 = vmatpush1.msra.mxu0 %v397
    %1657 = vmatprep.subr.mxu0 0.0
    %1658 = vmatpush1.msra.mxu0 %v400
    %1659 = vmatprep.subr.mxu0 0.0
    %1660 = vmatpush1.msra.mxu0 %v403
    %1661 = vmatprep.subr.mxu0 0.0
    %1662 = vmatpush1.msra.mxu0 %v406
    %1663 = vmatprep.subr.mxu0 0.0
    %1664 = vmatpush1.msra.mxu0 %v409
    %1665 = vmatprep.subr.mxu0 0.0
    %1666 = vmatpush1.msra.mxu0 %v412
    %1667 = vmatprep.subr.mxu0 0.0
    %1668 = vmatpush1.msra.mxu0 %v415
    %1669 = vmatprep.subr.mxu0 0.0
    %1670 = vmatpush1.msra.mxu0 %v418
    %1671 = vmatprep.subr.mxu0 0.0
    %1672 = vmatpush1.msra.mxu0 %v421
    %1673 = vmatprep.subr.mxu0 0.0
    %1674 = vmatpush1.msra.mxu0 0.0
    %1675 = vmatprep.subr.mxu0 0.0
    %1676 = vmatpush1.msra.mxu0 0.0
    %1677 = vmatprep.subr.mxu0 0.0
    %1678 = vmatpush1.msra.mxu0 0.0
    %1679 = vmatprep.subr.mxu0 0.0
    %1680 = vmatpush1.msra.mxu0 0.0
    %1681 = vmatprep.subr.mxu0 0.0
    %1682 = vmatpush1.msra.mxu0 0.0
    %1683 = vmatprep.subr.mxu0 0.0
    %1684 = vmatpush1.msra.mxu0 0.0
    %1685 = vmatprep.subr.mxu0 0.0
    %1686 = vmatpush1.msra.mxu0 0.0
    %1687 = vmatprep.subr.mxu0 0.0
    %1688 = vmatpush1.msra.mxu0 0.0
    %1689 = vmatprep.subr.mxu0 0.0
    %1690 = vmatpush1.msra.mxu0 0.0
    %1691 = vmatprep.subr.mxu0 0.0
    %1692 = vmatpush1.msra.mxu0 0.0
    %1693 = vmatprep.subr.mxu0 0.0
    %1694 = vmatpush1.msra.mxu0 0.0
    %1695 = vmatprep.subr.mxu0 0.0
    %1696 = vmatpush1.msra.mxu0 0.0
    %1697 = vmatprep.subr.mxu0 0.0
    %1698 = vmatpush1.msra.mxu0 0.0
    %1699 = vmatprep.subr.mxu0 0.0
    %1700 = vmatpush1.msra.mxu0 0.0
    %1701 = vmatprep.subr.mxu0 0.0
    %1702 = vmatpush1.msra.mxu0 0.0
    %1703 = vmatprep.subr.mxu0 0.0
    %1704 = vmatpush1.msra.mxu0 0.0
    %1705 = vmatprep.mubr.f32.mxu0 0.0
    %1706 = vmatmul.mubr.f32.gmra.mrb[0].mxu0 %v1569
    %v1707 = vpop.f32.mrb[0].mxu0
    %v1708 = vadd.f32 0.0, %v1707
    %v1709 = vpop.f32.mrb[0].mxu0
    %1710 = vdwg.mxu0
    %v1711 = vadd.f32 %v265, %v1637
    %v1712 = vxor.u32 %v1711, 2147483648
    %v1713 = vmul.f32 %v1712, 1.442695
    %v1714 = vpow.pop %v1713
    %v1715 = vadd.f32 %v1714, 1.0
    %v1716 = vrcp.pop %v1715
    %v1717 = vmul.f32 1.0, %v1716
    %v1718 = vadd.f32 %v267, %v1639
    %v1719 = vxor.u32 %v1718, 2147483648
    %v1720 = vmul.f32 %v1719, 1.442695
    %v1721 = vpow.pop %v1720
    %v1722 = vadd.f32 %v1721, 1.0
    %v1723 = vrcp.pop %v1722
    %v1724 = vmul.f32 1.0, %v1723
    %v1725 = vadd.f32 %v1708, %v582
    %v1726 = vmul.f32 %v1717, %v1725
    %v1727 = vadd.f32 %v371, %v1726
    %v1728 = vtanh.pop %v1727
    %v1729 = vsub.f32 1.0, %v1724
    %v1730 = vmul.f32 %v1729, %v1728
    %v1731 = vmul.f32 %v1724, %v1569
    %v1732 = vadd.f32 %v1730, %v1731
    %v1733 = vtanh.pop %v1732
    %v1734 = vld [vmem:[#allocation8] sm:$0xff]
    %v1735 = vld [vmem:[#allocation8 + $0x8] sm:$0xff]
    %v1736 = vld [vmem:[#allocation8 + $0x10] sm:$0xff]
    %v1737 = vld [vmem:[#allocation8 + $0x18] sm:$0xff]
    %v1738 = vld [vmem:[#allocation8 + $0x20] sm:$0xff]
    %v1739 = vld [vmem:[#allocation8 + $0x28] sm:$0xff]
    %v1740 = vld [vmem:[#allocation8 + $0x30] sm:$0xff]
    %v1741 = vld [vmem:[#allocation8 + $0x38] sm:$0xff]
    %v1742 = vld [vmem:[#allocation8 + $0x40] sm:$0xff]
    %v1743 = vld [vmem:[#allocation8 + $0x48] sm:$0xff]
    %v1744 = vld [vmem:[#allocation8 + $0x50] sm:$0xff]
    %v1745 = vld [vmem:[#allocation8 + $0x58] sm:$0xff]
    %v1746 = vld [vmem:[#allocation8 + $0x60] sm:$0xff]
    %v1747 = vld [vmem:[#allocation8 + $0x68] sm:$0xff]
    %v1748 = vld [vmem:[#allocation8 + $0x70] sm:$0xff]
    %v1749 = vld [vmem:[#allocation8 + $0x78] sm:$0xff]
    %v1750 = vld [vmem:[#allocation8 + $0x80] sm:$0xff]
    %v1751 = vld [vmem:[#allocation8 + $0x88] sm:$0xff]
    %v1752 = vld [vmem:[#allocation8 + $0x90] sm:$0xff]
    %v1753 = vld [vmem:[#allocation8 + $0x98] sm:$0xff]
    %v1754 = vld [vmem:[#allocation8 + $0xa0] sm:$0xff]
    %v1755 = vld [vmem:[#allocation8 + $0xa8] sm:$0xff]
    %v1756 = vld [vmem:[#allocation8 + $0xb0] sm:$0xff]
    %v1757 = vld [vmem:[#allocation8 + $0xb8] sm:$0xff]
    %v1758 = vld [vmem:[#allocation8 + $0xc0] sm:$0xff]
    %v1759 = vld [vmem:[#allocation8 + $0xc8] sm:$0xff]
    %v1760 = vld [vmem:[#allocation8 + $0xd0] sm:$0xff]
    %v1761 = vld [vmem:[#allocation8 + $0xd8] sm:$0xff]
    %v1762 = vld [vmem:[#allocation8 + $0xe0] sm:$0xff]
    %v1763 = vld [vmem:[#allocation8 + $0xe8] sm:$0xff]
    %v1764 = vld [vmem:[#allocation8 + $0xf0] sm:$0xff]
    %v1765 = vld [vmem:[#allocation8 + $0xf8] sm:$0xff]
    %v1766 = vld [vmem:[%s6] sm:$0x3]
    %v1768 = vlaneseq
    %v1769 = vshrl.u32 %v1768, 7
    %v1770 = vsub.s32 0, %v1769
    %v1771 = vrot.slane %v1766, %v1770
    %v1772 = vlaneseq
    %v1773 = vshrl.u32 %v1772, 7
    %v1774 = vsub.s32 1, %v1773
    %v1775 = vrot.slane %v1766, %v1774
    %1778 = vmatprep.subr.mxu0 %v1735
    %1779 = vmatpush1.msra.mxu0 %v1734
    %1780 = vmatprep.subr.mxu0 %v1737
    %1781 = vmatpush1.msra.mxu0 %v1736
    %1782 = vmatprep.subr.mxu0 %v1739
    %1783 = vmatpush1.msra.mxu0 %v1738
    %1784 = vmatprep.subr.mxu0 %v1741
    %1785 = vmatpush1.msra.mxu0 %v1740
    %1786 = vmatprep.subr.mxu0 %v1743
    %1787 = vmatpush1.msra.mxu0 %v1742
    %1788 = vmatprep.subr.mxu0 %v1745
    %1789 = vmatpush1.msra.mxu0 %v1744
    %1790 = vmatprep.subr.mxu0 %v1747
    %1791 = vmatpush1.msra.mxu0 %v1746
    %1792 = vmatprep.subr.mxu0 %v1749
    %1793 = vmatpush1.msra.mxu0 %v1748
    %1794 = vmatprep.subr.mxu0 %v1751
    %1795 = vmatpush1.msra.mxu0 %v1750
    %1796 = vmatprep.subr.mxu0 %v1753
    %1797 = vmatpush1.msra.mxu0 %v1752
    %1798 = vmatprep.subr.mxu0 %v1755
    %1799 = vmatpush1.msra.mxu0 %v1754
    %1800 = vmatprep.subr.mxu0 %v1757
    %1801 = vmatpush1.msra.mxu0 %v1756
    %1802 = vmatprep.subr.mxu0 %v1759
    %1803 = vmatpush1.msra.mxu0 %v1758
    %1804 = vmatprep.subr.mxu0 %v1761
    %1805 = vmatpush1.msra.mxu0 %v1760
    %1806 = vmatprep.subr.mxu0 %v1763
    %1807 = vmatpush1.msra.mxu0 %v1762
    %1808 = vmatprep.subr.mxu0 %v1765
    %1809 = vmatpush1.msra.mxu0 %v1764
    %1810 = vmatprep.subr.mxu0 0.0
    %1811 = vmatpush1.msra.mxu0 0.0
    %1812 = vmatprep.subr.mxu0 0.0
    %1813 = vmatpush1.msra.mxu0 0.0
    %1814 = vmatprep.subr.mxu0 0.0
    %1815 = vmatpush1.msra.mxu0 0.0
    %1816 = vmatprep.subr.mxu0 0.0
    %1817 = vmatpush1.msra.mxu0 0.0
    %1818 = vmatprep.subr.mxu0 0.0
    %1819 = vmatpush1.msra.mxu0 0.0
    %1820 = vmatprep.subr.mxu0 0.0
    %1821 = vmatpush1.msra.mxu0 0.0
    %1822 = vmatprep.subr.mxu0 0.0
    %1823 = vmatpush1.msra.mxu0 0.0
    %1824 = vmatprep.subr.mxu0 0.0
    %1825 = vmatpush1.msra.mxu0 0.0
    %1826 = vmatprep.subr.mxu0 0.0
    %1827 = vmatpush1.msra.mxu0 0.0
    %1828 = vmatprep.subr.mxu0 0.0
    %1829 = vmatpush1.msra.mxu0 0.0
    %1830 = vmatprep.subr.mxu0 0.0
    %1831 = vmatpush1.msra.mxu0 0.0
    %1832 = vmatprep.subr.mxu0 0.0
    %1833 = vmatpush1.msra.mxu0 0.0
    %1834 = vmatprep.subr.mxu0 0.0
    %1835 = vmatpush1.msra.mxu0 0.0
    %1836 = vmatprep.subr.mxu0 0.0
    %1837 = vmatpush1.msra.mxu0 0.0
    %1838 = vmatprep.subr.mxu0 0.0
    %1839 = vmatpush1.msra.mxu0 0.0
    %1840 = vmatprep.subr.mxu0 0.0
    %1841 = vmatpush1.msra.mxu0 0.0
    %1842 = vmatprep.mubr.f32.mxu0 0.0
    %1843 = vmatmul.mubr.f32.gmra.mrb[0].mxu0 %v1733
    %v1844 = vpop.f32.mrb[0].mxu0
    %v1845 = vadd.f32 %v1771, %v1844
    %v1846 = vpop.f32.mrb[0].mxu0
    %v1847 = vadd.f32 %v1775, %v1846
    %1848 = vdwg.mxu0
    %1849 = vst [vmem:[#allocation10] sm:$0xff] %v1845
    %1850 = vst [vmem:[#allocation10 + $0x8] sm:$0xff] %v1847
    // Predicated region
    $region46: #{tpu_custom_call.1} parent=1 // pred_check
      _
    $region47: #{tpu_custom_call.1} parent=1 // pred_check_branch
      %1852 = sbr.rel (0) target = $region49
    $region48: #{tpu_custom_call.1} parent=1 // pred_region
      %s1854 = ssub.s32 256, 256
      %1855 = vsyncadd [#allocation4], %s1854
      %s1857 = sshll.u32 [#allocation10], 4
      %s1858 = int_to_ptr.vmem [resolvable:$true] %s1857
      %1860 = dma.vmem_to_hbm [thread:$0]  %s1858, 256, %s7, [#allocation4]
    $region49: #{tpu_custom_call.1} parent=1 // pred_fallthru
      _
    // Predicated region
    $region50: #{tpu_custom_call.1} parent=1 // pred_check
      _
    $region51: #{tpu_custom_call.1} parent=1 // pred_check_branch
      %1862 = sbr.rel (0) target = $region53
    $region52: #{tpu_custom_call.1} parent=1 // pred_region
      %1863 = dma.done [#allocation4], 256
    $region53: #{tpu_custom_call.1} parent=1 // pred_fallthru
      _
    %1864 = vsyncpa [#allocation3], 1
    %1865 = vsyncpa [#allocation6], 1
    %1866 = vsyncpa [#allocation9], 1
    %1867 = vsyncpa [#allocation4], 1

</llo_original>
